<compile_context>
chip_gen: v7x
topology: tpu7x:2x2x1
jax: 0.10.0
libtpu: 0.0.40
codegen_flags: <defaults>
</compile_context>

<pallas_src>
import functools

import jax
import jax.numpy as jnp
import numpy as np
from jax.experimental import pallas as pl
from jax.experimental.pallas import tpu as pltpu


# ----------------------------------------------------------------------------
# Kernel
# ----------------------------------------------------------------------------
def _attnpool_kernel(tokens_ref, pos0_ref, posr_ref, wq_ref, bq_ref,
                     wkv_ref, bkv_ref, wc_ref, bc_ref,
                     hmask_ref, hmaskt_ref, o_ref, *,
                     num_heads: int, hw_valid: int):
    f32 = jnp.float32
    tokens = tokens_ref[...]                       # (B, HWp, C) bf16
    B, HWp, C = tokens.shape
    head_dim = C // num_heads
    scale = head_dim ** -0.5

    # ---- folded glue: mean (class) token + positional embedding ----
    # Padded HW rows are zero, so summing over HWp and dividing by the true
    # HW gives the exact mean of the valid rows.
    mean_tok = jnp.sum(tokens.astype(f32), axis=1) * (1.0 / hw_valid)   # (B,C)
    x0 = mean_tok + pos0_ref[...]                  # (B, C) f32 (query row)
    x0_c = x0.astype(tokens.dtype)                 # bf16 for MXU

    x_hw = tokens + posr_ref[...][None, :, :]      # (B, HWp, C) bf16
    x_hw_flat = x_hw.reshape(B * HWp, C)           # HWp % 8 == 0 -> free reshape

    # ---- projections (bf16 MXU inputs, f32 accumulation) ----
    q = jnp.dot(x0_c, wq_ref[...], preferred_element_type=f32) + bq_ref[...]
    q = q * scale                                  # (B, C) f32

    kv0 = jnp.dot(x0_c, wkv_ref[...], preferred_element_type=f32) + bkv_ref[...]
    k0 = kv0[:, :C]                                # (B, C) f32
    v0 = kv0[:, C:]                                # (B, C) f32

    # Largest per-step intermediate: store it in bf16 (softmax stats stay f32).
    kv_hw = (jnp.dot(x_hw_flat, wkv_ref[...], preferred_element_type=f32)
             + bkv_ref[...]).astype(tokens.dtype)  # (B*HWp, 2C) bf16
    k_hw = kv_hw[:, :C].reshape(B, HWp, C)
    v_hw = kv_hw[:, C:].reshape(B, HWp, C)

    # ---- fused-head attention for the single query token ----
    hmask = hmask_ref[...]                         # (C, H) f32 (score parity)
    hmask_t = hmaskt_ref[...]                      # (H, C) bf16 (prob expand)

    s0 = jnp.dot(q * k0, hmask, preferred_element_type=f32)            # (B, H)
    qk_hw = (q[:, None, :] * k_hw).reshape(B * HWp, C)                 # f32
    s_hw = jnp.dot(qk_hw, hmask,
                   preferred_element_type=f32).reshape(B, HWp, num_heads)

    if HWp != hw_valid:                            # mask padded HW rows
        pos_ids = jax.lax.broadcasted_iota(jnp.int32, (B, HWp, num_heads), 1)
        s_hw = jnp.where(pos_ids < hw_valid, s_hw, -1e30)

    m = jnp.maximum(s0, jnp.max(s_hw, axis=1))     # (B, H)
    e0 = jnp.exp(s0 - m)
    e_hw = jnp.exp(s_hw - m[:, None, :])
    denom = e0 + jnp.sum(e_hw, axis=1)
    inv = pl.reciprocal(denom, approx=True)        # EUP slot
    p0 = e0 * inv                                  # (B, H) f32
    p_hw = (e_hw * inv[:, None, :]).astype(hmask_t.dtype)   # (B, HWp, H) bf16

    p0_exp = jnp.dot(p0.astype(hmask_t.dtype), hmask_t,
                     preferred_element_type=f32)                       # (B, C)
    p_hw_exp = jnp.dot(p_hw.reshape(B * HWp, num_heads), hmask_t,
                       preferred_element_type=f32).reshape(B, HWp, C)

    attn = p0_exp * v0 + jnp.sum(p_hw_exp * v_hw, axis=1)              # (B, C) f32

    # ---- output projection (lane-dense padded O) ----
    out = jnp.dot(attn.astype(wc_ref.dtype), wc_ref[...],
                  preferred_element_type=f32) + bc_ref[...]            # (B, O_pad)
    o_ref[...] = out.astype(o_ref.dtype)


# ----------------------------------------------------------------------------
# Wrapper
# ----------------------------------------------------------------------------
def _vmem_capacity_bytes():
    try:
        info = pltpu.get_tpu_info()
        cap = getattr(info, "vmem_capacity_bytes", None)
        if cap:
            return int(cap)
    except Exception:
        pass
    return 128 << 20


def _nbytes(shape, dtype):
    return int(np.prod(shape)) * jnp.dtype(dtype).itemsize


def attention_pool_2d(x, params, num_heads: int, *, b_tile: int | None = None):
    """x: (N, C, H, W) float32. Returns (N, output_dim)."""
    N, C, H, W = x.shape
    HW = H * W
    HWp = ((HW + 7) // 8) * 8                      # sublane-aligned spatial dim

    pos_emb = params["positional_embedding"]       # (HW+1, C)
    wq, bq = params["q_proj"]                      # (C, C), (C,)
    wk, bk = params["k_proj"]
    wv, bv = params["v_proj"]
    wc, bc = params["c_proj"]                      # (O, C), (O,)
    O = wc.shape[0]
    head_dim = C // num_heads
    assert head_dim * num_heads == C

    cdtype = jnp.bfloat16
    f32 = jnp.float32

    # ---- chip-aware batch tiling ----
    vmem_cap = _vmem_capacity_bytes()
    if b_tile is None:
        b_tile = 16 if vmem_cap <= (64 << 20) else 32   # v7x vs v5e/v6e
    b_tile = max(1, min(int(b_tile), N))
    if b_tile < N:
        b_tile = min(((b_tile + 7) // 8) * 8, N)        # multi-block: keep %8
    if b_tile == N and N >= 16:
        # Split so the "parallel" batch axis feeds both TensorCores.
        b_tile = ((pl.cdiv(N, 2) + 7) // 8) * 8
    n_blocks = pl.cdiv(N, b_tile)
    n_pad = n_blocks * b_tile

    # Lane-dense padded output dim.
    o_pad = ((O + 127) // 128) * 128

    # ---- wrapper glue: NCHW -> (N, HWp, C) bf16 tokens (cast BEFORE transpose) ----
    tokens = x.astype(cdtype).reshape(N, C, HW).transpose(0, 2, 1)     # (N, HW, C)
    tokens = jnp.pad(tokens, ((0, n_pad - N), (0, HWp - HW), (0, 0)))

    pos0 = pos_emb[:1].astype(f32)                                     # (1, C)
    pos_rest = jnp.pad(pos_emb[1:], ((0, HWp - HW), (0, 0))).astype(cdtype)

    # Pre-transposed weights (x @ W^T), K/V stacked, output padded.
    wq_t = wq.T.astype(cdtype)                                         # (C, C)
    wkv_t = jnp.concatenate([wk.T, wv.T], axis=1).astype(cdtype)       # (C, 2C)
    wc_t = jnp.pad(wc.T, ((0, 0), (0, o_pad - O))).astype(cdtype)      # (C, o_pad)

    bq2 = bq[None].astype(f32)                                         # (1, C)
    bkv2 = jnp.concatenate([bk, bv])[None].astype(f32)                 # (1, 2C)
    bc2 = jnp.pad(bc, (0, o_pad - O))[None].astype(f32)                # (1, o_pad)

    # Head-membership mask: hmask[c, h] = 1 iff lane c belongs to head h.
    lane_head = jnp.arange(C, dtype=jnp.int32) // head_dim
    hmask = (lane_head[:, None]
             == jnp.arange(num_heads, dtype=jnp.int32)[None, :]).astype(f32)
    hmask_t = jnp.transpose(hmask).astype(cdtype)                      # (H, C) bf16

    # ---- VMEM budget (single-buffered constants + double-buffered tiles) ----
    const_bytes = (_nbytes((1, C), f32) + _nbytes((HWp, C), cdtype)
                   + _nbytes((C, C), cdtype) + _nbytes((1, C), f32)
                   + _nbytes((C, 2 * C), cdtype) + _nbytes((1, 2 * C), f32)
                   + _nbytes((C, o_pad), cdtype) + _nbytes((1, o_pad), f32)
                   + _nbytes((C, num_heads), f32) + _nbytes((num_heads, C), cdtype))
    pipelined_bytes = 2 * (_nbytes((b_tile, HWp, C), cdtype)
                           + _nbytes((b_tile, o_pad), f32))
    interm_bytes = b_tile * HWp * (C * 28 + num_heads * 16)   # rough, with slack
    need = const_bytes + pipelined_bytes + interm_bytes + (8 << 20)
    vmem_limit = int(min(max(need, 32 << 20), vmem_cap - (8 << 20)))

    # ---- cost estimate (KV matmul dominates) ----
    flops = int(2 * n_pad * ((HWp + 1) * C * 2 * C          # kv projection
                             + C * C                        # q projection
                             + 2 * (HWp + 1) * C * num_heads  # score + expand
                             + C * o_pad))                   # output projection
    transcendentals = int(n_pad * (HWp + 1) * num_heads)
    bytes_accessed = int(_nbytes((n_pad, HWp, C), cdtype) + const_bytes
                         + _nbytes((n_pad, o_pad), f32))
    cost = pl.CostEstimate(flops=flops, transcendentals=transcendentals,
                           bytes_accessed=bytes_accessed)

    # Constant blocks: single-buffered (never re-DMA'd).
    try:
        _const_pipe = {"pipeline_mode": pl.Buffered(1)}
    except Exception:                                        # pragma: no cover
        _const_pipe = {}

    def const_spec(shape):
        nd = len(shape)
        return pl.BlockSpec(shape, lambda n, _nd=nd: (0,) * _nd, **_const_pipe)

    kernel = functools.partial(_attnpool_kernel, num_heads=num_heads,
                               hw_valid=HW)

    out = pl.pallas_call(
        kernel,
        out_shape=jax.ShapeDtypeStruct((n_pad, o_pad), f32),
        grid=(n_blocks,),
        in_specs=[
            pl.BlockSpec((b_tile, HWp, C), lambda n: (n, 0, 0)),   # tokens
            const_spec((1, C)),                                    # pos0
            const_spec((HWp, C)),                                  # pos_rest
            const_spec((C, C)),                                    # wq^T
            const_spec((1, C)),                                    # bq
            const_spec((C, 2 * C)),                                # [wk|wv]^T
            const_spec((1, 2 * C)),                                # [bk|bv]
            const_spec((C, o_pad)),                                # wc^T (padded)
            const_spec((1, o_pad)),                                # bc   (padded)
            const_spec((C, num_heads)),                            # head mask
            const_spec((num_heads, C)),                            # head mask^T
        ],
        out_specs=pl.BlockSpec((b_tile, o_pad), lambda n: (n, 0)),
        compiler_params=pltpu.CompilerParams(
            dimension_semantics=("parallel",),
            vmem_limit_bytes=vmem_limit),
        cost_estimate=cost,
    )(tokens, pos0, pos_rest, wq_t, bq2, wkv_t, bkv2, wc_t, bc2,
      hmask, hmask_t)

    return out[:N, :O].astype(x.dtype)


# ----------------------------------------------------------------------------
# Pure-JAX reference (mirrors F.multi_head_attention_forward) + params
# ----------------------------------------------------------------------------
def reference_attention_pool_2d(x, params, num_heads: int):
    N, C, H, W = x.shape
    HW = H * W
    pos_emb = params["positional_embedding"]
    wq, bq = params["q_proj"]
    wk, bk = params["k_proj"]
    wv, bv = params["v_proj"]
    wc, bc = params["c_proj"]
    head_dim = C // num_heads
    scale = head_dim ** -0.5

    tokens = x.reshape(N, C, HW).transpose(0, 2, 1)
    mean_tok = jnp.mean(tokens, axis=1, keepdims=True)
    xf = jnp.concatenate([mean_tok, tokens], axis=1) + pos_emb[None]   # (N,L,C)

    q = xf[:, :1, :] @ wq.T + bq
    k = xf @ wk.T + bk
    v = xf @ wv.T + bv
    q = q * scale

    L = xf.shape[1]
    qh = q.reshape(N, 1, num_heads, head_dim).transpose(0, 2, 1, 3)
    kh = k.reshape(N, L, num_heads, head_dim).transpose(0, 2, 1, 3)
    vh = v.reshape(N, L, num_heads, head_dim).transpose(0, 2, 1, 3)
    s = jnp.einsum("nhqd,nhkd->nhqk", qh, kh)
    p = jax.nn.softmax(s, axis=-1)
    o = jnp.einsum("nhqk,nhkd->nhqd", p, vh)
    o = o.transpose(0, 2, 1, 3).reshape(N, 1, C)
    out = o @ wc.T + bc
    return out[:, 0, :]


def init_params(key, spacial_dim, embed_dim, output_dim):
    ks = jax.random.split(key, 9)
    L = spacial_dim ** 2 + 1

    def linear(kw, kb, out_f, in_f):
        bound = 1.0 / np.sqrt(in_f)
        w = jax.random.uniform(kw, (out_f, in_f), jnp.float32, -bound, bound)
        b = jax.random.uniform(kb, (out_f,), jnp.float32, -bound, bound)
        return w, b

    return {
        "positional_embedding":
            jax.random.normal(ks[0], (L, embed_dim), jnp.float32)
            / embed_dim ** 0.5,
        "q_proj": linear(ks[1], ks[2], embed_dim, embed_dim),
        "k_proj": linear(ks[3], ks[4], embed_dim, embed_dim),
        "v_proj": linear(ks[5], ks[6], embed_dim, embed_dim),
        "c_proj": linear(ks[7], ks[8], output_dim, embed_dim),
    }


if __name__ == "__main__":
    # Small shapes consistent with the module: NCHW input, C == embed_dim,
    # H == W == spacial_dim, embed_dim divisible by num_heads.
    batch, embed_dim, spacial_dim = 2, 64, 8
    num_heads, output_dim = 4, 64

    key = jax.random.PRNGKey(0)
    k_x, k_p = jax.random.split(key)
    x = jax.random.normal(k_x, (batch, embed_dim, spacial_dim, spacial_dim),
                          jnp.float32)
    params = init_params(k_p, spacial_dim, embed_dim, output_dim)

    out = attention_pool_2d(x, params, num_heads)
    out = jax.block_until_ready(out)

    ref = jax.block_until_ready(
        reference_attention_pool_2d(x, params, num_heads))

    assert out.shape == (batch, output_dim), out.shape
    # bf16 matmul inputs (f32 accumulation) => loosen tolerance vs f32 reference.
    np.testing.assert_allclose(np.asarray(out), np.asarray(ref),
                               rtol=2e-2, atol=2e-2)
    print("KERNEL_OK")
</pallas_src>

<mosaic_0001>
module attributes {stable_mosaic.version = 11 : i64} {
  func.func @_attnpool_kernel(%arg0: i32, %arg1: memref<2x64x64xbf16, #tpu.memory_space<vmem>>, %arg2: memref<1x64xf32, #tpu.memory_space<vmem>>, %arg3: memref<64x64xbf16, #tpu.memory_space<vmem>>, %arg4: memref<64x64xbf16, #tpu.memory_space<vmem>>, %arg5: memref<1x64xf32, #tpu.memory_space<vmem>>, %arg6: memref<64x128xbf16, #tpu.memory_space<vmem>>, %arg7: memref<1x128xf32, #tpu.memory_space<vmem>>, %arg8: memref<64x128xbf16, #tpu.memory_space<vmem>>, %arg9: memref<1x128xf32, #tpu.memory_space<vmem>>, %arg10: memref<64x4xf32, #tpu.memory_space<vmem>>, %arg11: memref<4x64xbf16, #tpu.memory_space<vmem>>, %arg12: memref<2x128xf32, #tpu.memory_space<vmem>>) attributes {dimension_semantics = [#tpu.dimension_semantics<parallel>], iteration_bounds = array<i64: 1>, scalar_prefetch = 0 : i64, scratch_operands = 0 : i64, tpu.core_type = #tpu.core_type<tc>, window_params = [{transform_indices = @transform_0, window_bounds = array<i64: 2, 64, 64>}, {pipeline_mode = #tpu.pipeline_mode<synchronous>, transform_indices = @transform_1, window_bounds = array<i64: 1, 64>}, {pipeline_mode = #tpu.pipeline_mode<synchronous>, transform_indices = @transform_2, window_bounds = array<i64: 64, 64>}, {pipeline_mode = #tpu.pipeline_mode<synchronous>, transform_indices = @transform_3, window_bounds = array<i64: 64, 64>}, {pipeline_mode = #tpu.pipeline_mode<synchronous>, transform_indices = @transform_4, window_bounds = array<i64: 1, 64>}, {pipeline_mode = #tpu.pipeline_mode<synchronous>, transform_indices = @transform_5, window_bounds = array<i64: 64, 128>}, {pipeline_mode = #tpu.pipeline_mode<synchronous>, transform_indices = @transform_6, window_bounds = array<i64: 1, 128>}, {pipeline_mode = #tpu.pipeline_mode<synchronous>, transform_indices = @transform_7, window_bounds = array<i64: 64, 128>}, {pipeline_mode = #tpu.pipeline_mode<synchronous>, transform_indices = @transform_8, window_bounds = array<i64: 1, 128>}, {pipeline_mode = #tpu.pipeline_mode<synchronous>, transform_indices = @transform_9, window_bounds = array<i64: 64, 4>}, {pipeline_mode = #tpu.pipeline_mode<synchronous>, transform_indices = @transform_10, window_bounds = array<i64: 4, 64>}, {transform_indices = @transform_11, window_bounds = array<i64: 2, 128>}]} {
    %c0 = arith.constant 0 : index
    %c0_0 = arith.constant 0 : index
    %c0_1 = arith.constant 0 : index
    %0 = vector.load %arg1[%c0, %c0_0, %c0_1] : memref<2x64x64xbf16, #tpu.memory_space<vmem>>, vector<2x64x64xbf16>
    %1 = arith.extf %0 : vector<2x64x64xbf16> to vector<2x64x64xf32>
    %cst = arith.constant dense<0.000000e+00> : vector<2x64xf32>
    %2 = vector.multi_reduction <add>, %1, %cst [1] : vector<2x64x64xf32> to vector<2x64xf32>
    %cst_2 = arith.constant 1.562500e-02 : f32
    %3 = vector.broadcast %cst_2 : f32 to vector<2x64xf32>
    %4 = arith.mulf %2, %3 : vector<2x64xf32>
    %c0_3 = arith.constant 0 : index
    %c0_4 = arith.constant 0 : index
    %5 = vector.load %arg2[%c0_3, %c0_4] : memref<1x64xf32, #tpu.memory_space<vmem>>, vector<1x64xf32>
    %6 = vector.broadcast %5 : vector<1x64xf32> to vector<2x64xf32>
    %7 = arith.addf %4, %6 : vector<2x64xf32>
    %8 = arith.truncf %7 : vector<2x64xf32> to vector<2x64xbf16>
    %c0_5 = arith.constant 0 : index
    %c0_6 = arith.constant 0 : index
    %9 = vector.load %arg3[%c0_5, %c0_6] : memref<64x64xbf16, #tpu.memory_space<vmem>>, vector<64x64xbf16>
    %10 = vector.shape_cast %9 : vector<64x64xbf16> to vector<1x64x64xbf16>
    %11 = vector.broadcast %10 : vector<1x64x64xbf16> to vector<2x64x64xbf16>
    %12 = arith.addf %0, %11 : vector<2x64x64xbf16>
    %13 = vector.shape_cast %12 : vector<2x64x64xbf16> to vector<128x64xbf16>
    %c0_7 = arith.constant 0 : index
    %c0_8 = arith.constant 0 : index
    %14 = vector.load %arg4[%c0_7, %c0_8] : memref<64x64xbf16, #tpu.memory_space<vmem>>, vector<64x64xbf16>
    %cst_9 = arith.constant dense<0.000000e+00> : vector<2x64xf32>
    %15 = tpu.matmul %8, %14, %cst_9 {dimension_numbers = #tpu.dot_dimension_numbers<[1], [0], [0], [1], [0, 0, 1, 1], [], []>} : vector<2x64xbf16>, vector<64x64xbf16>, vector<2x64xf32> -> vector<2x64xf32>
    %c0_10 = arith.constant 0 : index
    %c0_11 = arith.constant 0 : index
    %16 = vector.load %arg5[%c0_10, %c0_11] : memref<1x64xf32, #tpu.memory_space<vmem>>, vector<1x64xf32>
    %17 = vector.broadcast %16 : vector<1x64xf32> to vector<2x64xf32>
    %18 = arith.addf %15, %17 : vector<2x64xf32>
    %cst_12 = arith.constant 2.500000e-01 : f32
    %19 = vector.broadcast %cst_12 : f32 to vector<2x64xf32>
    %20 = arith.mulf %18, %19 : vector<2x64xf32>
    %c0_13 = arith.constant 0 : index
    %c0_14 = arith.constant 0 : index
    %21 = vector.load %arg6[%c0_13, %c0_14] : memref<64x128xbf16, #tpu.memory_space<vmem>>, vector<64x128xbf16>
    %cst_15 = arith.constant dense<0.000000e+00> : vector<2x128xf32>
    %22 = tpu.matmul %8, %21, %cst_15 {dimension_numbers = #tpu.dot_dimension_numbers<[1], [0], [0], [1], [0, 0, 1, 1], [], []>} : vector<2x64xbf16>, vector<64x128xbf16>, vector<2x128xf32> -> vector<2x128xf32>
    %c0_16 = arith.constant 0 : index
    %c0_17 = arith.constant 0 : index
    %23 = vector.load %arg7[%c0_16, %c0_17] : memref<1x128xf32, #tpu.memory_space<vmem>>, vector<1x128xf32>
    %24 = vector.broadcast %23 : vector<1x128xf32> to vector<2x128xf32>
    %25 = arith.addf %22, %24 : vector<2x128xf32>
    %26 = vector.extract_strided_slice %25 {offsets = [0, 0], sizes = [2, 64], strides = [1, 1]} : vector<2x128xf32> to vector<2x64xf32>
    %27 = vector.extract_strided_slice %25 {offsets = [0, 64], sizes = [2, 64], strides = [1, 1]} : vector<2x128xf32> to vector<2x64xf32>
    %c0_18 = arith.constant 0 : index
    %c0_19 = arith.constant 0 : index
    %28 = vector.load %arg6[%c0_18, %c0_19] : memref<64x128xbf16, #tpu.memory_space<vmem>>, vector<64x128xbf16>
    %cst_20 = arith.constant dense<0.000000e+00> : vector<128x128xf32>
    %29 = tpu.matmul %13, %28, %cst_20 {dimension_numbers = #tpu.dot_dimension_numbers<[1], [0], [0], [1], [0, 0, 1, 1], [], []>} : vector<128x64xbf16>, vector<64x128xbf16>, vector<128x128xf32> -> vector<128x128xf32>
    %c0_21 = arith.constant 0 : index
    %c0_22 = arith.constant 0 : index
    %30 = vector.load %arg7[%c0_21, %c0_22] : memref<1x128xf32, #tpu.memory_space<vmem>>, vector<1x128xf32>
    %31 = vector.broadcast %30 : vector<1x128xf32> to vector<128x128xf32>
    %32 = arith.addf %29, %31 : vector<128x128xf32>
    %33 = arith.truncf %32 : vector<128x128xf32> to vector<128x128xbf16>
    %34 = vector.extract_strided_slice %33 {offsets = [0, 0], sizes = [128, 64], strides = [1, 1]} : vector<128x128xbf16> to vector<128x64xbf16>
    %35 = vector.shape_cast %34 : vector<128x64xbf16> to vector<2x64x64xbf16>
    %36 = vector.extract_strided_slice %33 {offsets = [0, 64], sizes = [128, 64], strides = [1, 1]} : vector<128x128xbf16> to vector<128x64xbf16>
    %37 = vector.shape_cast %36 : vector<128x64xbf16> to vector<2x64x64xbf16>
    %c0_23 = arith.constant 0 : index
    %c0_24 = arith.constant 0 : index
    %38 = vector.load %arg10[%c0_23, %c0_24] : memref<64x4xf32, #tpu.memory_space<vmem>>, vector<64x4xf32>
    %c0_25 = arith.constant 0 : index
    %c0_26 = arith.constant 0 : index
    %39 = vector.load %arg11[%c0_25, %c0_26] : memref<4x64xbf16, #tpu.memory_space<vmem>>, vector<4x64xbf16>
    %40 = arith.mulf %20, %26 : vector<2x64xf32>
    %cst_27 = arith.constant dense<0.000000e+00> : vector<2x4xf32>
    %41 = tpu.matmul %40, %38, %cst_27 {dimension_numbers = #tpu.dot_dimension_numbers<[1], [0], [0], [1], [0, 0, 1, 1], [], []>} : vector<2x64xf32>, vector<64x4xf32>, vector<2x4xf32> -> vector<2x4xf32>
    %42 = vector.shape_cast %20 : vector<2x64xf32> to vector<2x1x64xf32>
    %43 = arith.extf %35 : vector<2x64x64xbf16> to vector<2x64x64xf32>
    %44 = vector.broadcast %42 : vector<2x1x64xf32> to vector<2x64x64xf32>
    %45 = arith.mulf %44, %43 : vector<2x64x64xf32>
    %46 = vector.shape_cast %45 : vector<2x64x64xf32> to vector<128x64xf32>
    %cst_28 = arith.constant dense<0.000000e+00> : vector<128x4xf32>
    %47 = tpu.matmul %46, %38, %cst_28 {dimension_numbers = #tpu.dot_dimension_numbers<[1], [0], [0], [1], [0, 0, 1, 1], [], []>} : vector<128x64xf32>, vector<64x4xf32>, vector<128x4xf32> -> vector<128x4xf32>
    %48 = vector.shape_cast %47 : vector<128x4xf32> to vector<2x64x4xf32>
    %cst_29 = arith.constant dense<0xFF800000> : vector<2x4xf32>
    %49 = vector.multi_reduction <maximumf>, %48, %cst_29 [1] : vector<2x64x4xf32> to vector<2x4xf32>
    %50 = arith.maximumf %41, %49 : vector<2x4xf32>
    %51 = arith.subf %41, %50 : vector<2x4xf32>
    %52 = math.exp %51 : vector<2x4xf32>
    %53 = vector.shape_cast %50 : vector<2x4xf32> to vector<2x1x4xf32>
    %54 = vector.broadcast %53 : vector<2x1x4xf32> to vector<2x64x4xf32>
    %55 = arith.subf %48, %54 : vector<2x64x4xf32>
    %56 = math.exp %55 : vector<2x64x4xf32>
    %cst_30 = arith.constant dense<0.000000e+00> : vector<2x4xf32>
    %57 = vector.multi_reduction <add>, %56, %cst_30 [1] : vector<2x64x4xf32> to vector<2x4xf32>
    %58 = arith.addf %52, %57 : vector<2x4xf32>
    %59 = tpu.reciprocal %58 {approx = true} : vector<2x4xf32> -> vector<2x4xf32>
    %60 = arith.mulf %52, %59 : vector<2x4xf32>
    %61 = vector.shape_cast %59 : vector<2x4xf32> to vector<2x1x4xf32>
    %62 = vector.broadcast %61 : vector<2x1x4xf32> to vector<2x64x4xf32>
    %63 = arith.mulf %56, %62 : vector<2x64x4xf32>
    %64 = arith.truncf %63 : vector<2x64x4xf32> to vector<2x64x4xbf16>
    %65 = arith.truncf %60 : vector<2x4xf32> to vector<2x4xbf16>
    %cst_31 = arith.constant dense<0.000000e+00> : vector<2x64xf32>
    %66 = tpu.matmul %65, %39, %cst_31 {dimension_numbers = #tpu.dot_dimension_numbers<[1], [0], [0], [1], [0, 0, 1, 1], [], []>} : vector<2x4xbf16>, vector<4x64xbf16>, vector<2x64xf32> -> vector<2x64xf32>
    %67 = vector.shape_cast %64 : vector<2x64x4xbf16> to vector<128x4xbf16>
    %cst_32 = arith.constant dense<0.000000e+00> : vector<128x64xf32>
    %68 = tpu.matmul %67, %39, %cst_32 {dimension_numbers = #tpu.dot_dimension_numbers<[1], [0], [0], [1], [0, 0, 1, 1], [], []>} : vector<128x4xbf16>, vector<4x64xbf16>, vector<128x64xf32> -> vector<128x64xf32>
    %69 = vector.shape_cast %68 : vector<128x64xf32> to vector<2x64x64xf32>
    %70 = arith.mulf %66, %27 : vector<2x64xf32>
    %71 = arith.extf %37 : vector<2x64x64xbf16> to vector<2x64x64xf32>
    %72 = arith.mulf %69, %71 : vector<2x64x64xf32>
    %cst_33 = arith.constant dense<0.000000e+00> : vector<2x64xf32>
    %73 = vector.multi_reduction <add>, %72, %cst_33 [1] : vector<2x64x64xf32> to vector<2x64xf32>
    %74 = arith.addf %70, %73 : vector<2x64xf32>
    %75 = arith.truncf %74 : vector<2x64xf32> to vector<2x64xbf16>
    %c0_34 = arith.constant 0 : index
    %c0_35 = arith.constant 0 : index
    %76 = vector.load %arg8[%c0_34, %c0_35] : memref<64x128xbf16, #tpu.memory_space<vmem>>, vector<64x128xbf16>
    %cst_36 = arith.constant dense<0.000000e+00> : vector<2x128xf32>
    %77 = tpu.matmul %75, %76, %cst_36 {dimension_numbers = #tpu.dot_dimension_numbers<[1], [0], [0], [1], [0, 0, 1, 1], [], []>} : vector<2x64xbf16>, vector<64x128xbf16>, vector<2x128xf32> -> vector<2x128xf32>
    %c0_37 = arith.constant 0 : index
    %c0_38 = arith.constant 0 : index
    %78 = vector.load %arg9[%c0_37, %c0_38] : memref<1x128xf32, #tpu.memory_space<vmem>>, vector<1x128xf32>
    %79 = vector.broadcast %78 : vector<1x128xf32> to vector<2x128xf32>
    %80 = arith.addf %77, %79 : vector<2x128xf32>
    %c0_39 = arith.constant 0 : index
    %c0_40 = arith.constant 0 : index
    %81 = vector.load %arg12[%c0_39, %c0_40] : memref<2x128xf32, #tpu.memory_space<vmem>>, vector<2x128xf32>
    tpu.vector_store %arg12[%c0_39, %c0_40], %80 {strides = array<i32>} : memref<2x128xf32, #tpu.memory_space<vmem>>, vector<2x128xf32>,
    return
  }
  func.func @transform_0(%arg0: i32) -> (i32, i32, i32) {
    %c0_i32 = arith.constant 0 : i32
    %c0_i32_0 = arith.constant 0 : i32
    %c0_i32_1 = arith.constant 0 : i32
    return %arg0, %c0_i32, %c0_i32_0 : i32, i32, i32
  }
  func.func @transform_1(%arg0: i32) -> (i32, i32) {
    %c0_i32 = arith.constant 0 : i32
    %c0_i32_0 = arith.constant 0 : i32
    %c0_i32_1 = arith.constant 0 : i32
    return %c0_i32, %c0_i32_0 : i32, i32
  }
  func.func @transform_2(%arg0: i32) -> (i32, i32) {
    %c0_i32 = arith.constant 0 : i32
    %c0_i32_0 = arith.constant 0 : i32
    %c0_i32_1 = arith.constant 0 : i32
    return %c0_i32, %c0_i32_0 : i32, i32
  }
  func.func @transform_3(%arg0: i32) -> (i32, i32) {
    %c0_i32 = arith.constant 0 : i32
    %c0_i32_0 = arith.constant 0 : i32
    %c0_i32_1 = arith.constant 0 : i32
    return %c0_i32, %c0_i32_0 : i32, i32
  }
  func.func @transform_4(%arg0: i32) -> (i32, i32) {
    %c0_i32 = arith.constant 0 : i32
    %c0_i32_0 = arith.constant 0 : i32
    %c0_i32_1 = arith.constant 0 : i32
    return %c0_i32, %c0_i32_0 : i32, i32
  }
  func.func @transform_5(%arg0: i32) -> (i32, i32) {
    %c0_i32 = arith.constant 0 : i32
    %c0_i32_0 = arith.constant 0 : i32
    %c0_i32_1 = arith.constant 0 : i32
    return %c0_i32, %c0_i32_0 : i32, i32
  }
  func.func @transform_6(%arg0: i32) -> (i32, i32) {
    %c0_i32 = arith.constant 0 : i32
    %c0_i32_0 = arith.constant 0 : i32
    %c0_i32_1 = arith.constant 0 : i32
    return %c0_i32, %c0_i32_0 : i32, i32
  }
  func.func @transform_7(%arg0: i32) -> (i32, i32) {
    %c0_i32 = arith.constant 0 : i32
    %c0_i32_0 = arith.constant 0 : i32
    %c0_i32_1 = arith.constant 0 : i32
    return %c0_i32, %c0_i32_0 : i32, i32
  }
  func.func @transform_8(%arg0: i32) -> (i32, i32) {
    %c0_i32 = arith.constant 0 : i32
    %c0_i32_0 = arith.constant 0 : i32
    %c0_i32_1 = arith.constant 0 : i32
    return %c0_i32, %c0_i32_0 : i32, i32
  }
  func.func @transform_9(%arg0: i32) -> (i32, i32) {
    %c0_i32 = arith.constant 0 : i32
    %c0_i32_0 = arith.constant 0 : i32
    %c0_i32_1 = arith.constant 0 : i32
    return %c0_i32, %c0_i32_0 : i32, i32
  }
  func.func @transform_10(%arg0: i32) -> (i32, i32) {
    %c0_i32 = arith.constant 0 : i32
    %c0_i32_0 = arith.constant 0 : i32
    %c0_i32_1 = arith.constant 0 : i32
    return %c0_i32, %c0_i32_0 : i32, i32
  }
  func.func @transform_11(%arg0: i32) -> (i32, i32) {
    %c0_i32 = arith.constant 0 : i32
    %c0_i32_0 = arith.constant 0 : i32
    return %arg0, %c0_i32 : i32, i32
  }
}

</mosaic_0001>

<llo_original>
// kernel: tpu_custom_call.1
$region0: #{tpu_custom_call.1}
  #allocation0 [shape = 'u32[]', space=smem, size = 0x4, offset = 0x4, fixed_abs, tag = 'smem constant byte address 0x4 - core index']
  #allocation1 [shape = 'u32[144,128]{1,0:T(1,128)}', space=vmem, size = 0x12000, scoped, tag = 'internal scratch']
  %s0 = inlined_call_operand.vmem [shape: bf16[2,64,64], index: 0, kind: input, shape index: {}]
  %s1 = inlined_call_operand.vmem [shape: f32[1,64], index: 1, kind: input, shape index: {}]
  %s2 = inlined_call_operand.hbm [shape: bf16[64,64], index: 2, kind: input, shape index: {}]
  %s3 = inlined_call_operand.hbm [shape: bf16[64,64], index: 3, kind: input, shape index: {}]
  %s4 = inlined_call_operand.vmem [shape: f32[1,64], index: 4, kind: input, shape index: {}]
  %s5 = inlined_call_operand.hbm [shape: bf16[64,128], index: 5, kind: input, shape index: {}]
  %s6 = inlined_call_operand.vmem [shape: f32[1,128], index: 6, kind: input, shape index: {}]
  %s7 = inlined_call_operand.hbm [shape: bf16[64,128], index: 7, kind: input, shape index: {}]
  %s8 = inlined_call_operand.vmem [shape: f32[1,128], index: 8, kind: input, shape index: {}]
  %s9 = inlined_call_operand.vmem [shape: f32[64,4], index: 9, kind: input, shape index: {}]
  %s10 = inlined_call_operand.vmem [shape: bf16[4,64], index: 10, kind: input, shape index: {}]
  %s11 = inlined_call_operand.hbm [shape: f32[2,128], index: 11, kind: output, shape index: {}]
  %s12 = sld [smem:[#allocation0]]
  $region70: #{tpu_custom_call.1} parent=0
    _
  %s14 = ssub.s32 1, %s12
  %s15 = scalar_select 0, %s14, %s12
  $region1: #{tpu_custom_call.1} parent=0
    #allocation2 [shape = 'u8[16384]{0}', space=vmem, size = 0x4000, scoped, tag = 'input window, operand 2, single buffered']
    #allocation3 [shape = 's32[1]{0}', space=sflag, size = 0x4, scoped, tag = 'scoped memory for tpu_custom_call.1']
    #allocation4 [shape = 's32[1]{0}', space=sflag, size = 0x4, scoped, tag = 'scoped memory for tpu_custom_call.1']
    #allocation5 [shape = 'u8[16384]{0}', space=vmem, size = 0x4000, scoped, tag = 'input window, operand 3, single buffered']
    #allocation6 [shape = 's32[1]{0}', space=sflag, size = 0x4, scoped, tag = 'scoped memory for tpu_custom_call.1']
    #allocation7 [shape = 'u8[16384]{0}', space=vmem, size = 0x4000, scoped, tag = 'input window, operand 5, single buffered']
    #allocation8 [shape = 'u8[16384]{0}', space=vmem, size = 0x4000, scoped, tag = 'input window, operand 7, single buffered']
    #allocation9 [shape = 's32[1]{0}', space=sflag, size = 0x4, scoped, tag = 'scoped memory for tpu_custom_call.1']
    #allocation10 [shape = 'u8[1024]{0}', space=vmem, size = 0x400, scoped, tag = 'output window, operand 0, single buffered']
    %16 = vsyncpa [#allocation3], 0
    %17 = vsyncpa [#allocation6], 0
    %18 = vsyncpa [#allocation9], 0
    %19 = vsyncpa [#allocation4], 0
    // Predicated region
    $region2: #{tpu_custom_call.1} parent=1 // pred_check
      _
    $region3: #{tpu_custom_call.1} parent=1 // pred_check_branch
      %21 = sbr.rel (0) target = $region5
    $region4: #{tpu_custom_call.1} parent=1 // pred_region
      _
    $region5: #{tpu_custom_call.1} parent=1 // pred_fallthru
      _
    // Predicated region
    $region6: #{tpu_custom_call.1} parent=1 // pred_check
      _
    $region7: #{tpu_custom_call.1} parent=1 // pred_check_branch
      %23 = sbr.rel (0) target = $region9
    $region8: #{tpu_custom_call.1} parent=1 // pred_region
      _
    $region9: #{tpu_custom_call.1} parent=1 // pred_fallthru
      _
    // Predicated region
    $region10: #{tpu_custom_call.1} parent=1 // pred_check
      _
    $region11: #{tpu_custom_call.1} parent=1 // pred_check_branch
      %25 = sbr.rel (0) target = $region13
    $region12: #{tpu_custom_call.1} parent=1 // pred_region
      %s27 = ssub.s32 512, 512
      %28 = vsyncadd [#allocation3], %s27
      %s29 = sshll.u32 [#allocation2], 4
      %s30 = int_to_ptr.vmem [resolvable:$true] %s29
      %35 = dma.hbm_to_vmem [thread:$0]  %s2, 512, %s30, [#allocation3], 64, 64, 4
    $region13: #{tpu_custom_call.1} parent=1 // pred_fallthru
      _
    // Predicated region
    $region14: #{tpu_custom_call.1} parent=1 // pred_check
      _
    $region15: #{tpu_custom_call.1} parent=1 // pred_check_branch
      %37 = sbr.rel (0) target = $region17
    $region16: #{tpu_custom_call.1} parent=1 // pred_region
      %s39 = ssub.s32 512, 512
      %40 = vsyncadd [#allocation6], %s39
      %s41 = sshll.u32 [#allocation5], 4
      %s42 = int_to_ptr.vmem [resolvable:$true] %s41
      %47 = dma.hbm_to_vmem [thread:$0]  %s3, 512, %s42, [#allocation6], 64, 64, 4
    $region17: #{tpu_custom_call.1} parent=1 // pred_fallthru
      _
    // Predicated region
    $region18: #{tpu_custom_call.1} parent=1 // pred_check
      _
    $region19: #{tpu_custom_call.1} parent=1 // pred_check_branch
      %49 = sbr.rel (0) target = $region21
    $region20: #{tpu_custom_call.1} parent=1 // pred_region
      _
    $region21: #{tpu_custom_call.1} parent=1 // pred_fallthru
      _
    // Predicated region
    $region22: #{tpu_custom_call.1} parent=1 // pred_check
      _
    $region23: #{tpu_custom_call.1} parent=1 // pred_check_branch
      %51 = sbr.rel (0) target = $region25
    $region24: #{tpu_custom_call.1} parent=1 // pred_region
      %s53 = ssub.s32 512, 512
      %54 = vsyncadd [#allocation6], %s53
      %s55 = sshll.u32 [#allocation7], 4
      %s56 = int_to_ptr.vmem [resolvable:$true] %s55
      %61 = dma.hbm_to_vmem [thread:$0]  %s5, 512, %s56, [#allocation6], 64, 64, 4
    $region25: #{tpu_custom_call.1} parent=1 // pred_fallthru
      _
    // Predicated region
    $region26: #{tpu_custom_call.1} parent=1 // pred_check
      _
    $region27: #{tpu_custom_call.1} parent=1 // pred_check_branch
      %63 = sbr.rel (0) target = $region29
    $region28: #{tpu_custom_call.1} parent=1 // pred_region
      _
    $region29: #{tpu_custom_call.1} parent=1 // pred_fallthru
      _
    // Predicated region
    $region30: #{tpu_custom_call.1} parent=1 // pred_check
      _
    $region31: #{tpu_custom_call.1} parent=1 // pred_check_branch
      %65 = sbr.rel (0) target = $region33
    $region32: #{tpu_custom_call.1} parent=1 // pred_region
      %s67 = ssub.s32 512, 512
      %68 = vsyncadd [#allocation9], %s67
      %s69 = sshll.u32 [#allocation8], 4
      %s70 = int_to_ptr.vmem [resolvable:$true] %s69
      %75 = dma.hbm_to_vmem [thread:$0]  %s7, 512, %s70, [#allocation9], 64, 64, 4
    $region33: #{tpu_custom_call.1} parent=1 // pred_fallthru
      _
    // Predicated region
    $region34: #{tpu_custom_call.1} parent=1 // pred_check
      _
    $region35: #{tpu_custom_call.1} parent=1 // pred_check_branch
      %77 = sbr.rel (0) target = $region37
    $region36: #{tpu_custom_call.1} parent=1 // pred_region
      _
    $region37: #{tpu_custom_call.1} parent=1 // pred_fallthru
      _
    // Predicated region
    $region38: #{tpu_custom_call.1} parent=1 // pred_check
      _
    $region39: #{tpu_custom_call.1} parent=1 // pred_check_branch
      %79 = sbr.rel (0) target = $region41
    $region40: #{tpu_custom_call.1} parent=1 // pred_region
      _
    $region41: #{tpu_custom_call.1} parent=1 // pred_fallthru
      _
    // Predicated region
    $region42: #{tpu_custom_call.1} parent=1 // pred_check
      _
    $region43: #{tpu_custom_call.1} parent=1 // pred_check_branch
      %81 = sbr.rel (0) target = $region45
    $region44: #{tpu_custom_call.1} parent=1 // pred_region
      _
    $region45: #{tpu_custom_call.1} parent=1 // pred_fallthru
      _
    // Predicated region
    $region46: #{tpu_custom_call.1} parent=1 // pred_check
      _
    $region47: #{tpu_custom_call.1} parent=1 // pred_check_branch
      %83 = sbr.rel (0) target = $region49
    $region48: #{tpu_custom_call.1} parent=1 // pred_region
      %84 = dma.done [#allocation3], 512
    $region49: #{tpu_custom_call.1} parent=1 // pred_fallthru
      _
    // Predicated region
    $region50: #{tpu_custom_call.1} parent=1 // pred_check
      _
    $region51: #{tpu_custom_call.1} parent=1 // pred_check_branch
      %86 = sbr.rel (0) target = $region53
    $region52: #{tpu_custom_call.1} parent=1 // pred_region
      %87 = dma.done [#allocation6], 512
    $region53: #{tpu_custom_call.1} parent=1 // pred_fallthru
      _
    // Predicated region
    $region54: #{tpu_custom_call.1} parent=1 // pred_check
      _
    $region55: #{tpu_custom_call.1} parent=1 // pred_check_branch
      %89 = sbr.rel (0) target = $region57
    $region56: #{tpu_custom_call.1} parent=1 // pred_region
      %90 = dma.done [#allocation6], 512
    $region57: #{tpu_custom_call.1} parent=1 // pred_fallthru
      _
    // Predicated region
    $region58: #{tpu_custom_call.1} parent=1 // pred_check
      _
    $region59: #{tpu_custom_call.1} parent=1 // pred_check_branch
      %92 = sbr.rel (0) target = $region61
    $region60: #{tpu_custom_call.1} parent=1 // pred_region
      %93 = dma.done [#allocation9], 512
    $region61: #{tpu_custom_call.1} parent=1 // pred_fallthru
      _
    %v95 = vld [vmem:[%s0] sm:$0xf]
    %v96 = vld [vmem:[%s0 + $0x4] sm:$0xf]
    %v97 = vld [vmem:[%s0 + $0x8] sm:$0xf]
    %v98 = vld [vmem:[%s0 + $0xc] sm:$0xf]
    %v99 = vld [vmem:[%s0 + $0x10] sm:$0xf]
    %v100 = vld [vmem:[%s0 + $0x14] sm:$0xf]
    %v101 = vld [vmem:[%s0 + $0x18] sm:$0xf]
    %v102 = vld [vmem:[%s0 + $0x1c] sm:$0xf]
    %v103 = vld [vmem:[%s0 + $0x20] sm:$0xf]
    %v104 = vld [vmem:[%s0 + $0x24] sm:$0xf]
    %v105 = vld [vmem:[%s0 + $0x28] sm:$0xf]
    %v106 = vld [vmem:[%s0 + $0x2c] sm:$0xf]
    %v107 = vld [vmem:[%s0 + $0x30] sm:$0xf]
    %v108 = vld [vmem:[%s0 + $0x34] sm:$0xf]
    %v109 = vld [vmem:[%s0 + $0x38] sm:$0xf]
    %v110 = vld [vmem:[%s0 + $0x3c] sm:$0xf]
    %v111 = vunpack.c.l.bf16 %v95
    %v112 = vunpack.c.l.bf16 %v96
    %v113 = vunpack.c.l.bf16 %v97
    %v114 = vunpack.c.l.bf16 %v98
    %v115 = vunpack.c.l.bf16 %v99
    %v116 = vunpack.c.l.bf16 %v100
    %v117 = vunpack.c.l.bf16 %v101
    %v118 = vunpack.c.l.bf16 %v102
    %v119 = vunpack.c.l.bf16 %v103
    %v120 = vunpack.c.l.bf16 %v104
    %v121 = vunpack.c.l.bf16 %v105
    %v122 = vunpack.c.l.bf16 %v106
    %v123 = vunpack.c.l.bf16 %v107
    %v124 = vunpack.c.l.bf16 %v108
    %v125 = vunpack.c.l.bf16 %v109
    %v126 = vunpack.c.l.bf16 %v110
    %vm127 = vcmask 523264
    %v128 = vsel %vm127, %v111, 0.0
    %v129 = vsel %vm127, %v112, 0.0
    %v130 = vadd.f32 %v128, %v129
    %v131 = vsel %vm127, %v113, 0.0
    %v132 = vadd.f32 %v130, %v131
    %v133 = vsel %vm127, %v114, 0.0
    %v134 = vadd.f32 %v132, %v133
    %v135 = vsel %vm127, %v115, 0.0
    %v136 = vadd.f32 %v134, %v135
    %v137 = vsel %vm127, %v116, 0.0
    %v138 = vadd.f32 %v136, %v137
    %v139 = vsel %vm127, %v117, 0.0
    %v140 = vadd.f32 %v138, %v139
    %v141 = vsel %vm127, %v118, 0.0
    %v142 = vadd.f32 %v140, %v141
    %v143 = vrot.slane %v142, 4
    %v144 = vadd.f32 %v142, %v143
    %v145 = vrot.slane %v144, 2
    %v146 = vadd.f32 %v144, %v145
    %v147 = vrot.slane %v146, 1
    %v148 = vadd.f32 %v146, %v147
    %v149 = vsel %vm127, %v119, 0.0
    %v150 = vsel %vm127, %v120, 0.0
    %v151 = vadd.f32 %v149, %v150
    %v152 = vsel %vm127, %v121, 0.0
    %v153 = vadd.f32 %v151, %v152
    %v154 = vsel %vm127, %v122, 0.0
    %v155 = vadd.f32 %v153, %v154
    %v156 = vsel %vm127, %v123, 0.0
    %v157 = vadd.f32 %v155, %v156
    %v158 = vsel %vm127, %v124, 0.0
    %v159 = vadd.f32 %v157, %v158
    %v160 = vsel %vm127, %v125, 0.0
    %v161 = vadd.f32 %v159, %v160
    %v162 = vsel %vm127, %v126, 0.0
    %v163 = vadd.f32 %v161, %v162
    %v164 = vrot.slane %v163, 4
    %v165 = vadd.f32 %v163, %v164
    %v166 = vrot.slane %v165, 2
    %v167 = vadd.f32 %v165, %v166
    %v168 = vrot.slane %v167, 1
    %v169 = vadd.f32 %v167, %v168
    %v170 = vmul.f32 %v148, 0.015625
    %v171 = vmul.f32 %v169, 0.015625
    %v172 = vld [vmem:[%s1] sm:$0x1]
    %v174 = vlaneseq
    %v175 = vshrl.u32 %v174, 7
    %v176 = vsub.s32 0, %v175
    %v177 = vrot.slane %v172, %v176
    %v179 = vadd.f32 %v170, %v177
    %v180 = vadd.f32 %v171, %v177
    %v181 = vpack.c.bf16 %v179, %v179
    %v182 = vpack.c.bf16 %v180, %v180
    %v183 = vld [vmem:[#allocation2] sm:$0xf]
    %v184 = vld [vmem:[#allocation2 + $0x4] sm:$0xf]
    %v185 = vld [vmem:[#allocation2 + $0x8] sm:$0xf]
    %v186 = vld [vmem:[#allocation2 + $0xc] sm:$0xf]
    %v187 = vld [vmem:[#allocation2 + $0x10] sm:$0xf]
    %v188 = vld [vmem:[#allocation2 + $0x14] sm:$0xf]
    %v189 = vld [vmem:[#allocation2 + $0x18] sm:$0xf]
    %v190 = vld [vmem:[#allocation2 + $0x1c] sm:$0xf]
    %v191 = vadd.bf16 %v95, %v183
    %v192 = vadd.bf16 %v96, %v184
    %v193 = vadd.bf16 %v97, %v185
    %v194 = vadd.bf16 %v98, %v186
    %v195 = vadd.bf16 %v99, %v187
    %v196 = vadd.bf16 %v100, %v188
    %v197 = vadd.bf16 %v101, %v189
    %v198 = vadd.bf16 %v102, %v190
    %v199 = vadd.bf16 %v103, %v183
    %v200 = vadd.bf16 %v104, %v184
    %v201 = vadd.bf16 %v105, %v185
    %v202 = vadd.bf16 %v106, %v186
    %v203 = vadd.bf16 %v107, %v187
    %v204 = vadd.bf16 %v108, %v188
    %v205 = vadd.bf16 %v109, %v189
    %v206 = vadd.bf16 %v110, %v190
    %v207 = vld [vmem:[#allocation5] sm:$0xf]
    %v208 = vld [vmem:[#allocation5 + $0x4] sm:$0xf]
    %v209 = vld [vmem:[#allocation5 + $0x8] sm:$0xf]
    %v210 = vld [vmem:[#allocation5 + $0xc] sm:$0xf]
    %v211 = vld [vmem:[#allocation5 + $0x10] sm:$0xf]
    %v212 = vld [vmem:[#allocation5 + $0x14] sm:$0xf]
    %v213 = vld [vmem:[#allocation5 + $0x18] sm:$0xf]
    %v214 = vld [vmem:[#allocation5 + $0x1c] sm:$0xf]
    %v215 = vld [vmem:[%s4] sm:$0x1]
    %v217 = vlaneseq
    %v218 = vshrl.u32 %v217, 7
    %v219 = vsub.s32 0, %v218
    %v220 = vrot.slane %v215, %v219
    %v224 = vunpack.c.l.b16 %v181
    %v225 = vunpack.c.l.b16 %v182
    %v226 = vrot.slane %v225, 7
    %vm227 = vcmask 1041409
    %v228 = vsel %vm227, %v226, %v224
    %v229 = vpack.c.b16 %v228, %v228
    %v238 = vunpack.c.l.b16 %v207
    %v239 = vunpack.c.l.b16 %v208
    %v240 = vunpack.c.l.b16 %v209
    %v241 = vunpack.c.l.b16 %v210
    %v242 = vunpack.c.l.b16 %v211
    %v243 = vunpack.c.l.b16 %v212
    %v244 = vunpack.c.l.b16 %v213
    %v245 = vunpack.c.l.b16 %v214
    %v246 = vpack.c.b16 %v239, %v238
    %v247 = vpack.c.b16 %v241, %v240
    %v248 = vpack.c.b16 %v243, %v242
    %v249 = vpack.c.b16 %v245, %v244
    %v255 = vsel %vm127, %v229, 0
    %257 = vmatprep.subr.bf16.mxu0 0
    %258 = vmatpush1.bf16.msra.mxu0 %v246
    %259 = vmatprep.subr.bf16.mxu0 0
    %260 = vmatpush1.bf16.msra.mxu0 %v247
    %261 = vmatprep.subr.bf16.mxu0 0
    %262 = vmatpush1.bf16.msra.mxu0 %v248
    %263 = vmatprep.subr.bf16.mxu0 0
    %264 = vmatpush1.bf16.msra.mxu0 %v249
    %265 = vmatprep.subr.bf16.mxu0 0
    %266 = vmatpush1.bf16.msra.mxu0 0
    %267 = vmatprep.subr.bf16.mxu0 0
    %268 = vmatpush1.bf16.msra.mxu0 0
    %269 = vmatprep.subr.bf16.mxu0 0
    %270 = vmatpush1.bf16.msra.mxu0 0
    %271 = vmatprep.subr.bf16.mxu0 0
    %272 = vmatpush1.bf16.msra.mxu0 0
    %273 = vmatprep.subr.bf16.mxu0 0
    %274 = vmatpush1.bf16.msra.mxu0 0
    %275 = vmatprep.subr.bf16.mxu0 0
    %276 = vmatpush1.bf16.msra.mxu0 0
    %277 = vmatprep.subr.bf16.mxu0 0
    %278 = vmatpush1.bf16.msra.mxu0 0
    %279 = vmatprep.subr.bf16.mxu0 0
    %280 = vmatpush1.bf16.msra.mxu0 0
    %281 = vmatprep.subr.bf16.mxu0 0
    %282 = vmatpush1.bf16.msra.mxu0 0
    %283 = vmatprep.subr.bf16.mxu0 0
    %284 = vmatpush1.bf16.msra.mxu0 0
    %285 = vmatprep.subr.bf16.mxu0 0
    %286 = vmatpush1.bf16.msra.mxu0 0
    %287 = vmatprep.subr.bf16.mxu0 0
    %288 = vmatpush1.bf16.msra.mxu0 0
    %289 = vmatprep.mubr.bf16.mxu0 0
    %290 = vmatmul.mubr.bf16.gmra.mrb[0].mxu0 %v255
    %v291 = vpop.f32.mrb[0].mxu0
    %v292 = vadd.f32 %v220, %v291
    %v293 = vpop.f32.mrb[0].mxu0
    %v294 = vpop.f32.mrb[0].mxu0
    %v295 = vpop.f32.mrb[0].mxu0
    %296 = vdwg.mxu0
    %v297 = vmul.f32 %v292, 0.25
    %v298 = vld [vmem:[#allocation7] sm:$0xf]
    %v299 = vld [vmem:[#allocation7 + $0x4] sm:$0xf]
    %v300 = vld [vmem:[#allocation7 + $0x8] sm:$0xf]
    %v301 = vld [vmem:[#allocation7 + $0xc] sm:$0xf]
    %v302 = vld [vmem:[#allocation7 + $0x10] sm:$0xf]
    %v303 = vld [vmem:[#allocation7 + $0x14] sm:$0xf]
    %v304 = vld [vmem:[#allocation7 + $0x18] sm:$0xf]
    %v305 = vld [vmem:[#allocation7 + $0x1c] sm:$0xf]
    %v306 = vld [vmem:[%s6] sm:$0x1]
    %v308 = vlaneseq
    %v309 = vshrl.u32 %v308, 7
    %v310 = vsub.s32 0, %v309
    %v311 = vrot.slane %v306, %v310
    %v321 = vunpack.c.l.b16 %v298
    %v322 = vunpack.c.l.b16 %v299
    %v323 = vunpack.c.l.b16 %v300
    %v324 = vunpack.c.l.b16 %v301
    %v325 = vunpack.c.l.b16 %v302
    %v326 = vunpack.c.l.b16 %v303
    %v327 = vunpack.c.l.b16 %v304
    %v328 = vunpack.c.l.b16 %v305
    %v329 = vpack.c.b16 %v322, %v321
    %v330 = vpack.c.b16 %v324, %v323
    %v331 = vpack.c.b16 %v326, %v325
    %v332 = vpack.c.b16 %v328, %v327
    %337 = vmatprep.subr.bf16.mxu0 0
    %338 = vmatpush1.bf16.msra.mxu0 %v329
    %339 = vmatprep.subr.bf16.mxu0 0
    %340 = vmatpush1.bf16.msra.mxu0 %v330
    %341 = vmatprep.subr.bf16.mxu0 0
    %342 = vmatpush1.bf16.msra.mxu0 %v331
    %343 = vmatprep.subr.bf16.mxu0 0
    %344 = vmatpush1.bf16.msra.mxu0 %v332
    %345 = vmatprep.subr.bf16.mxu0 0
    %346 = vmatpush1.bf16.msra.mxu0 0
    %347 = vmatprep.subr.bf16.mxu0 0
    %348 = vmatpush1.bf16.msra.mxu0 0
    %349 = vmatprep.subr.bf16.mxu0 0
    %350 = vmatpush1.bf16.msra.mxu0 0
    %351 = vmatprep.subr.bf16.mxu0 0
    %352 = vmatpush1.bf16.msra.mxu0 0
    %353 = vmatprep.subr.bf16.mxu0 0
    %354 = vmatpush1.bf16.msra.mxu0 0
    %355 = vmatprep.subr.bf16.mxu0 0
    %356 = vmatpush1.bf16.msra.mxu0 0
    %357 = vmatprep.subr.bf16.mxu0 0
    %358 = vmatpush1.bf16.msra.mxu0 0
    %359 = vmatprep.subr.bf16.mxu0 0
    %360 = vmatpush1.bf16.msra.mxu0 0
    %361 = vmatprep.subr.bf16.mxu0 0
    %362 = vmatpush1.bf16.msra.mxu0 0
    %363 = vmatprep.subr.bf16.mxu0 0
    %364 = vmatpush1.bf16.msra.mxu0 0
    %365 = vmatprep.subr.bf16.mxu0 0
    %366 = vmatpush1.bf16.msra.mxu0 0
    %367 = vmatprep.subr.bf16.mxu0 0
    %368 = vmatpush1.bf16.msra.mxu0 0
    %369 = vmatprep.mubr.bf16.mxu0 0
    %370 = vmatmul.mubr.bf16.gmra.mrb[0].mxu0 %v255
    %v371 = vpop.f32.mrb[0].mxu0
    %v372 = vadd.f32 %v311, %v371
    %v373 = vpop.f32.mrb[0].mxu0
    %v374 = vpop.f32.mrb[0].mxu0
    %v375 = vpop.f32.mrb[0].mxu0
    %376 = vdwg.mxu0
    %v393 = vunpack.c.l.b16 %v191
    %v394 = vunpack.c.l.b16 %v192
    %v395 = vunpack.c.l.b16 %v193
    %v396 = vunpack.c.l.b16 %v194
    %v397 = vunpack.c.l.b16 %v195
    %v398 = vunpack.c.l.b16 %v196
    %v399 = vunpack.c.l.b16 %v197
    %v400 = vunpack.c.l.b16 %v198
    %v401 = vunpack.c.l.b16 %v199
    %v402 = vunpack.c.l.b16 %v200
    %v403 = vunpack.c.l.b16 %v201
    %v404 = vunpack.c.l.b16 %v202
    %v405 = vunpack.c.l.b16 %v203
    %v406 = vunpack.c.l.b16 %v204
    %v407 = vunpack.c.l.b16 %v205
    %v408 = vunpack.c.l.b16 %v206
    %v409 = vpack.c.b16 %v394, %v393
    %v410 = vpack.c.b16 %v396, %v395
    %v411 = vpack.c.b16 %v398, %v397
    %v412 = vpack.c.b16 %v400, %v399
    %v413 = vpack.c.b16 %v402, %v401
    %v414 = vpack.c.b16 %v404, %v403
    %v415 = vpack.c.b16 %v406, %v405
    %v416 = vpack.c.b16 %v408, %v407
    %v418 = vsel %vm127, %v409, 0
    %v421 = vsel %vm127, %v410, 0
    %v424 = vsel %vm127, %v411, 0
    %v427 = vsel %vm127, %v412, 0
    %v430 = vsel %vm127, %v413, 0
    %v433 = vsel %vm127, %v414, 0
    %v436 = vsel %vm127, %v415, 0
    %v439 = vsel %vm127, %v416, 0
    %441 = vmatprep.subr.bf16.mxu0 0
    %442 = vmatpush1.bf16.msra.mxu0 %v329
    %443 = vmatprep.subr.bf16.mxu0 0
    %444 = vmatpush1.bf16.msra.mxu0 %v330
    %445 = vmatprep.subr.bf16.mxu0 0
    %446 = vmatpush1.bf16.msra.mxu0 %v331
    %447 = vmatprep.subr.bf16.mxu0 0
    %448 = vmatpush1.bf16.msra.mxu0 %v332
    %449 = vmatprep.subr.bf16.mxu0 0
    %450 = vmatpush1.bf16.msra.mxu0 0
    %451 = vmatprep.subr.bf16.mxu0 0
    %452 = vmatpush1.bf16.msra.mxu0 0
    %453 = vmatprep.subr.bf16.mxu0 0
    %454 = vmatpush1.bf16.msra.mxu0 0
    %455 = vmatprep.subr.bf16.mxu0 0
    %456 = vmatpush1.bf16.msra.mxu0 0
    %457 = vmatprep.subr.bf16.mxu0 0
    %458 = vmatpush1.bf16.msra.mxu0 0
    %459 = vmatprep.subr.bf16.mxu0 0
    %460 = vmatpush1.bf16.msra.mxu0 0
    %461 = vmatprep.subr.bf16.mxu0 0
    %462 = vmatpush1.bf16.msra.mxu0 0
    %463 = vmatprep.subr.bf16.mxu0 0
    %464 = vmatpush1.bf16.msra.mxu0 0
    %465 = vmatprep.subr.bf16.mxu0 0
    %466 = vmatpush1.bf16.msra.mxu0 0
    %467 = vmatprep.subr.bf16.mxu0 0
    %468 = vmatpush1.bf16.msra.mxu0 0
    %469 = vmatprep.subr.bf16.mxu0 0
    %470 = vmatpush1.bf16.msra.mxu0 0
    %471 = vmatprep.subr.bf16.mxu0 0
    %472 = vmatpush1.bf16.msra.mxu0 0
    %473 = vmatprep.mubr.bf16.mxu0 0
    %474 = vmatmul.mubr.bf16.gmra.mrb[0].mxu0 %v418
    %v475 = vpop.f32.mrb[0].mxu0
    %v476 = vadd.f32 %v311, %v475
    %v477 = vpop.f32.mrb[0].mxu0
    %v478 = vpop.f32.mrb[0].mxu0
    %v479 = vadd.f32 %v311, %v478
    %v480 = vpop.f32.mrb[0].mxu0
    %481 = vmatprep.mubr.bf16.mxu0 0
    %482 = vmatmul.mubr.bf16.gmra.mrb[0].mxu0 %v421
    %v483 = vpop.f32.mrb[0].mxu0
    %v484 = vadd.f32 %v311, %v483
    %v485 = vpop.f32.mrb[0].mxu0
    %v486 = vpop.f32.mrb[0].mxu0
    %v487 = vadd.f32 %v311, %v486
    %v488 = vpop.f32.mrb[0].mxu0
    %489 = vmatprep.mubr.bf16.mxu0 0
    %490 = vmatmul.mubr.bf16.gmra.mrb[0].mxu0 %v424
    %v491 = vpop.f32.mrb[0].mxu0
    %v492 = vadd.f32 %v311, %v491
    %v493 = vpop.f32.mrb[0].mxu0
    %v494 = vpop.f32.mrb[0].mxu0
    %v495 = vadd.f32 %v311, %v494
    %v496 = vpop.f32.mrb[0].mxu0
    %497 = vmatprep.mubr.bf16.mxu0 0
    %498 = vmatmul.mubr.bf16.gmra.mrb[0].mxu0 %v427
    %v499 = vpop.f32.mrb[0].mxu0
    %v500 = vadd.f32 %v311, %v499
    %v501 = vpop.f32.mrb[0].mxu0
    %v502 = vpop.f32.mrb[0].mxu0
    %v503 = vadd.f32 %v311, %v502
    %v504 = vpop.f32.mrb[0].mxu0
    %505 = vmatprep.mubr.bf16.mxu0 0
    %506 = vmatmul.mubr.bf16.gmra.mrb[0].mxu0 %v430
    %v507 = vpop.f32.mrb[0].mxu0
    %v508 = vadd.f32 %v311, %v507
    %v509 = vpop.f32.mrb[0].mxu0
    %v510 = vpop.f32.mrb[0].mxu0
    %v511 = vadd.f32 %v311, %v510
    %v512 = vpop.f32.mrb[0].mxu0
    %513 = vmatprep.mubr.bf16.mxu0 0
    %514 = vmatmul.mubr.bf16.gmra.mrb[0].mxu0 %v433
    %v515 = vpop.f32.mrb[0].mxu0
    %v516 = vadd.f32 %v311, %v515
    %v517 = vpop.f32.mrb[0].mxu0
    %v518 = vpop.f32.mrb[0].mxu0
    %v519 = vadd.f32 %v311, %v518
    %v520 = vpop.f32.mrb[0].mxu0
    %521 = vmatprep.mubr.bf16.mxu0 0
    %522 = vmatmul.mubr.bf16.gmra.mrb[0].mxu0 %v436
    %v523 = vpop.f32.mrb[0].mxu0
    %v524 = vadd.f32 %v311, %v523
    %v525 = vpop.f32.mrb[0].mxu0
    %v526 = vpop.f32.mrb[0].mxu0
    %v527 = vadd.f32 %v311, %v526
    %v528 = vpop.f32.mrb[0].mxu0
    %529 = vmatprep.mubr.bf16.mxu0 0
    %530 = vmatmul.mubr.bf16.gmra.mrb[0].mxu0 %v439
    %v531 = vpop.f32.mrb[0].mxu0
    %v532 = vadd.f32 %v311, %v531
    %v533 = vpop.f32.mrb[0].mxu0
    %v534 = vpop.f32.mrb[0].mxu0
    %v535 = vadd.f32 %v311, %v534
    %v536 = vpop.f32.mrb[0].mxu0
    %537 = vdwg.mxu0
    %v538 = vpack.c.bf16 %v479, %v476
    %v539 = vpack.c.bf16 %v487, %v484
    %v540 = vpack.c.bf16 %v495, %v492
    %v541 = vpack.c.bf16 %v503, %v500
    %v542 = vpack.c.bf16 %v511, %v508
    %v543 = vpack.c.bf16 %v519, %v516
    %v544 = vpack.c.bf16 %v527, %v524
    %v545 = vpack.c.bf16 %v535, %v532
    %v546 = vld [vmem:[%s9] sm:$0xff]
    %v547 = vld [vmem:[%s9 + $0x8] sm:$0xff]
    %v548 = vld [vmem:[%s9 + $0x10] sm:$0xff]
    %v549 = vld [vmem:[%s9 + $0x18] sm:$0xff]
    %v550 = vld [vmem:[%s9 + $0x20] sm:$0xff]
    %v551 = vld [vmem:[%s9 + $0x28] sm:$0xff]
    %v552 = vld [vmem:[%s9 + $0x30] sm:$0xff]
    %v553 = vld [vmem:[%s9 + $0x38] sm:$0xff]
    %v554 = vld [vmem:[%s10] sm:$0x3]
    %v555 = vmul.f32 %v297, %v372
    %v557 = vsel %vm127, %v555, 0
    %559 = vmatprep.subr.mxu0 0.0
    %560 = vmatpush1.msra.mxu0 %v546
    %561 = vmatprep.subr.mxu0 0.0
    %562 = vmatpush1.msra.mxu0 %v547
    %563 = vmatprep.subr.mxu0 0.0
    %564 = vmatpush1.msra.mxu0 %v548
    %565 = vmatprep.subr.mxu0 0.0
    %566 = vmatpush1.msra.mxu0 %v549
    %567 = vmatprep.subr.mxu0 0.0
    %568 = vmatpush1.msra.mxu0 %v550
    %569 = vmatprep.subr.mxu0 0.0
    %570 = vmatpush1.msra.mxu0 %v551
    %571 = vmatprep.subr.mxu0 0.0
    %572 = vmatpush1.msra.mxu0 %v552
    %573 = vmatprep.subr.mxu0 0.0
    %574 = vmatpush1.msra.mxu0 %v553
    %575 = vmatprep.subr.mxu0 0.0
    %576 = vmatpush1.msra.mxu0 0.0
    %577 = vmatprep.subr.mxu0 0.0
    %578 = vmatpush1.msra.mxu0 0.0
    %579 = vmatprep.subr.mxu0 0.0
    %580 = vmatpush1.msra.mxu0 0.0
    %581 = vmatprep.subr.mxu0 0.0
    %582 = vmatpush1.msra.mxu0 0.0
    %583 = vmatprep.subr.mxu0 0.0
    %584 = vmatpush1.msra.mxu0 0.0
    %585 = vmatprep.subr.mxu0 0.0
    %586 = vmatpush1.msra.mxu0 0.0
    %587 = vmatprep.subr.mxu0 0.0
    %588 = vmatpush1.msra.mxu0 0.0
    %589 = vmatprep.subr.mxu0 0.0
    %590 = vmatpush1.msra.mxu0 0.0
    %591 = vmatprep.subr.mxu0 0.0
    %592 = vmatpush1.msra.mxu0 0.0
    %593 = vmatprep.subr.mxu0 0.0
    %594 = vmatpush1.msra.mxu0 0.0
    %595 = vmatprep.subr.mxu0 0.0
    %596 = vmatpush1.msra.mxu0 0.0
    %597 = vmatprep.subr.mxu0 0.0
    %598 = vmatpush1.msra.mxu0 0.0
    %599 = vmatprep.subr.mxu0 0.0
    %600 = vmatpush1.msra.mxu0 0.0
    %601 = vmatprep.subr.mxu0 0.0
    %602 = vmatpush1.msra.mxu0 0.0
    %603 = vmatprep.subr.mxu0 0.0
    %604 = vmatpush1.msra.mxu0 0.0
    %605 = vmatprep.subr.mxu0 0.0
    %606 = vmatpush1.msra.mxu0 0.0
    %607 = vmatprep.subr.mxu0 0.0
    %608 = vmatpush1.msra.mxu0 0.0
    %609 = vmatprep.subr.mxu0 0.0
    %610 = vmatpush1.msra.mxu0 0.0
    %611 = vmatprep.subr.mxu0 0.0
    %612 = vmatpush1.msra.mxu0 0.0
    %613 = vmatprep.subr.mxu0 0.0
    %614 = vmatpush1.msra.mxu0 0.0
    %615 = vmatprep.subr.mxu0 0.0
    %616 = vmatpush1.msra.mxu0 0.0
    %617 = vmatprep.subr.mxu0 0.0
    %618 = vmatpush1.msra.mxu0 0.0
    %619 = vmatprep.subr.mxu0 0.0
    %620 = vmatpush1.msra.mxu0 0.0
    %621 = vmatprep.subr.mxu0 0.0
    %622 = vmatpush1.msra.mxu0 0.0
    %623 = vmatprep.mubr.f32.mxu0 0.0
    %624 = vmatmul.mubr.f32.gmra.mrb[0].mxu0 %v557
    %v625 = vpop.f32.mrb[0].mxu0
    %v626 = vadd.f32 0.0, %v625
    %v627 = vpop.f32.mrb[0].mxu0
    %628 = vdwg.mxu0
    %v631 = vunpack.c.l.s4 1966171168
    %v632 = vunpack.c.0.s8 %v631
    %v633 = vlaneseq
    %v634 = vshrl.u32 %v633, 7
    %v635 = vsub.s32 %v632, %v634
    %v636 = vrot.slane %v297, %v635
    %v637 = vcombine.high %v636, %v636
    %v639 = vunpack.c.l.s4 1966171168
    %v640 = vunpack.c.0.s8 %v639
    %v641 = vlaneseq
    %v642 = vshrl.u32 %v641, 7
    %v643 = vsub.s32 %v640, %v642
    %v644 = vrot.slane %v636, %v643
    %v646 = vunpack.c.l.s4 1966171168
    %v647 = vunpack.c.0.s8 %v646
    %v648 = vlaneseq
    %v649 = vshrl.u32 %v648, 7
    %v650 = vsub.s32 %v647, %v649
    %v651 = vrot.slane %v637, %v650
    %v652 = vunpack.c.l.bf16 %v538
    %v653 = vunpack.c.h.bf16 %v538
    %v654 = vunpack.c.l.bf16 %v539
    %v655 = vunpack.c.h.bf16 %v539
    %v656 = vunpack.c.l.bf16 %v540
    %v657 = vunpack.c.h.bf16 %v540
    %v658 = vunpack.c.l.bf16 %v541
    %v659 = vunpack.c.h.bf16 %v541
    %v660 = vunpack.c.l.bf16 %v542
    %v661 = vunpack.c.h.bf16 %v542
    %v662 = vunpack.c.l.bf16 %v543
    %v663 = vunpack.c.h.bf16 %v543
    %v664 = vunpack.c.l.bf16 %v544
    %v665 = vunpack.c.h.bf16 %v544
    %v666 = vunpack.c.l.bf16 %v545
    %v667 = vunpack.c.h.bf16 %v545
    %v668 = vlaneseq
    %v669 = vshrl.u32 %v668, 7
    %v670 = vsub.s32 0, %v669
    %v671 = vrot.slane %v644, %v670
    %v672 = vlaneseq
    %v673 = vshrl.u32 %v672, 7
    %v674 = vsub.s32 0, %v673
    %v675 = vrot.slane %v651, %v674
    %v678 = vmul.f32 %v671, %v652
    %v679 = vmul.f32 %v671, %v653
    %v680 = vmul.f32 %v671, %v654
    %v681 = vmul.f32 %v671, %v655
    %v682 = vmul.f32 %v671, %v656
    %v683 = vmul.f32 %v671, %v657
    %v684 = vmul.f32 %v671, %v658
    %v685 = vmul.f32 %v671, %v659
    %v686 = vmul.f32 %v675, %v660
    %v687 = vmul.f32 %v675, %v661
    %v688 = vmul.f32 %v675, %v662
    %v689 = vmul.f32 %v675, %v663
    %v690 = vmul.f32 %v675, %v664
    %v691 = vmul.f32 %v675, %v665
    %v692 = vmul.f32 %v675, %v666
    %v693 = vmul.f32 %v675, %v667
    %v695 = vsel %vm127, %v678, 0
    %v698 = vsel %vm127, %v679, 0
    %v701 = vsel %vm127, %v680, 0
    %v704 = vsel %vm127, %v681, 0
    %v707 = vsel %vm127, %v682, 0
    %v710 = vsel %vm127, %v683, 0
    %v713 = vsel %vm127, %v684, 0
    %v716 = vsel %vm127, %v685, 0
    %v719 = vsel %vm127, %v686, 0
    %v722 = vsel %vm127, %v687, 0
    %v725 = vsel %vm127, %v688, 0
    %v728 = vsel %vm127, %v689, 0
    %v731 = vsel %vm127, %v690, 0
    %v734 = vsel %vm127, %v691, 0
    %v737 = vsel %vm127, %v692, 0
    %v740 = vsel %vm127, %v693, 0
    %742 = vmatprep.subr.mxu0 0.0
    %743 = vmatpush1.msra.mxu0 %v546
    %744 = vmatprep.subr.mxu0 0.0
    %745 = vmatpush1.msra.mxu0 %v547
    %746 = vmatprep.subr.mxu0 0.0
    %747 = vmatpush1.msra.mxu0 %v548
    %748 = vmatprep.subr.mxu0 0.0
    %749 = vmatpush1.msra.mxu0 %v549
    %750 = vmatprep.subr.mxu0 0.0
    %751 = vmatpush1.msra.mxu0 %v550
    %752 = vmatprep.subr.mxu0 0.0
    %753 = vmatpush1.msra.mxu0 %v551
    %754 = vmatprep.subr.mxu0 0.0
    %755 = vmatpush1.msra.mxu0 %v552
    %756 = vmatprep.subr.mxu0 0.0
    %757 = vmatpush1.msra.mxu0 %v553
    %758 = vmatprep.subr.mxu0 0.0
    %759 = vmatpush1.msra.mxu0 0.0
    %760 = vmatprep.subr.mxu0 0.0
    %761 = vmatpush1.msra.mxu0 0.0
    %762 = vmatprep.subr.mxu0 0.0
    %763 = vmatpush1.msra.mxu0 0.0
    %764 = vmatprep.subr.mxu0 0.0
    %765 = vmatpush1.msra.mxu0 0.0
    %766 = vmatprep.subr.mxu0 0.0
    %767 = vmatpush1.msra.mxu0 0.0
    %768 = vmatprep.subr.mxu0 0.0
    %769 = vmatpush1.msra.mxu0 0.0
    %770 = vmatprep.subr.mxu0 0.0
    %771 = vmatpush1.msra.mxu0 0.0
    %772 = vmatprep.subr.mxu0 0.0
    %773 = vmatpush1.msra.mxu0 0.0
    %774 = vmatprep.subr.mxu0 0.0
    %775 = vmatpush1.msra.mxu0 0.0
    %776 = vmatprep.subr.mxu0 0.0
    %777 = vmatpush1.msra.mxu0 0.0
    %778 = vmatprep.subr.mxu0 0.0
    %779 = vmatpush1.msra.mxu0 0.0
    %780 = vmatprep.subr.mxu0 0.0
    %781 = vmatpush1.msra.mxu0 0.0
    %782 = vmatprep.subr.mxu0 0.0
    %783 = vmatpush1.msra.mxu0 0.0
    %784 = vmatprep.subr.mxu0 0.0
    %785 = vmatpush1.msra.mxu0 0.0
    %786 = vmatprep.subr.mxu0 0.0
    %787 = vmatpush1.msra.mxu0 0.0
    %788 = vmatprep.subr.mxu0 0.0
    %789 = vmatpush1.msra.mxu0 0.0
    %790 = vmatprep.subr.mxu0 0.0
    %791 = vmatpush1.msra.mxu0 0.0
    %792 = vmatprep.subr.mxu0 0.0
    %793 = vmatpush1.msra.mxu0 0.0
    %794 = vmatprep.subr.mxu0 0.0
    %795 = vmatpush1.msra.mxu0 0.0
    %796 = vmatprep.subr.mxu0 0.0
    %797 = vmatpush1.msra.mxu0 0.0
    %798 = vmatprep.subr.mxu0 0.0
    %799 = vmatpush1.msra.mxu0 0.0
    %800 = vmatprep.subr.mxu0 0.0
    %801 = vmatpush1.msra.mxu0 0.0
    %802 = vmatprep.subr.mxu0 0.0
    %803 = vmatpush1.msra.mxu0 0.0
    %804 = vmatprep.subr.mxu0 0.0
    %805 = vmatpush1.msra.mxu0 0.0
    %806 = vmatprep.mubr.f32.mxu0 0.0
    %807 = vmatmul.mubr.f32.gmra.mrb[0].mxu0 %v695
    %v808 = vpop.f32.mrb[0].mxu0
    %v809 = vadd.f32 0.0, %v808
    %v810 = vpop.f32.mrb[0].mxu0
    %811 = vmatprep.mubr.f32.mxu0 0.0
    %812 = vmatmul.mubr.f32.gmra.mrb[0].mxu0 %v698
    %v813 = vpop.f32.mrb[0].mxu0
    %v814 = vadd.f32 0.0, %v813
    %v815 = vpop.f32.mrb[0].mxu0
    %816 = vmatprep.mubr.f32.mxu0 0.0
    %817 = vmatmul.mubr.f32.gmra.mrb[0].mxu0 %v701
    %v818 = vpop.f32.mrb[0].mxu0
    %v819 = vadd.f32 0.0, %v818
    %v820 = vpop.f32.mrb[0].mxu0
    %821 = vmatprep.mubr.f32.mxu0 0.0
    %822 = vmatmul.mubr.f32.gmra.mrb[0].mxu0 %v704
    %v823 = vpop.f32.mrb[0].mxu0
    %v824 = vadd.f32 0.0, %v823
    %v825 = vpop.f32.mrb[0].mxu0
    %826 = vmatprep.mubr.f32.mxu0 0.0
    %827 = vmatmul.mubr.f32.gmra.mrb[0].mxu0 %v707
    %v828 = vpop.f32.mrb[0].mxu0
    %v829 = vadd.f32 0.0, %v828
    %v830 = vpop.f32.mrb[0].mxu0
    %831 = vmatprep.mubr.f32.mxu0 0.0
    %832 = vmatmul.mubr.f32.gmra.mrb[0].mxu0 %v710
    %v833 = vpop.f32.mrb[0].mxu0
    %v834 = vadd.f32 0.0, %v833
    %v835 = vpop.f32.mrb[0].mxu0
    %836 = vmatprep.mubr.f32.mxu0 0.0
    %837 = vmatmul.mubr.f32.gmra.mrb[0].mxu0 %v713
    %v838 = vpop.f32.mrb[0].mxu0
    %v839 = vadd.f32 0.0, %v838
    %v840 = vpop.f32.mrb[0].mxu0
    %841 = vmatprep.mubr.f32.mxu0 0.0
    %842 = vmatmul.mubr.f32.gmra.mrb[0].mxu0 %v716
    %v843 = vpop.f32.mrb[0].mxu0
    %v844 = vadd.f32 0.0, %v843
    %v845 = vpop.f32.mrb[0].mxu0
    %846 = vmatprep.mubr.f32.mxu0 0.0
    %847 = vmatmul.mubr.f32.gmra.mrb[0].mxu0 %v719
    %v848 = vpop.f32.mrb[0].mxu0
    %v849 = vadd.f32 0.0, %v848
    %v850 = vpop.f32.mrb[0].mxu0
    %851 = vmatprep.mubr.f32.mxu0 0.0
    %852 = vmatmul.mubr.f32.gmra.mrb[0].mxu0 %v722
    %v853 = vpop.f32.mrb[0].mxu0
    %v854 = vadd.f32 0.0, %v853
    %v855 = vpop.f32.mrb[0].mxu0
    %856 = vmatprep.mubr.f32.mxu0 0.0
    %857 = vmatmul.mubr.f32.gmra.mrb[0].mxu0 %v725
    %v858 = vpop.f32.mrb[0].mxu0
    %v859 = vadd.f32 0.0, %v858
    %v860 = vpop.f32.mrb[0].mxu0
    %861 = vmatprep.mubr.f32.mxu0 0.0
    %862 = vmatmul.mubr.f32.gmra.mrb[0].mxu0 %v728
    %v863 = vpop.f32.mrb[0].mxu0
    %v864 = vadd.f32 0.0, %v863
    %v865 = vpop.f32.mrb[0].mxu0
    %866 = vmatprep.mubr.f32.mxu0 0.0
    %867 = vmatmul.mubr.f32.gmra.mrb[0].mxu0 %v731
    %v868 = vpop.f32.mrb[0].mxu0
    %v869 = vadd.f32 0.0, %v868
    %v870 = vpop.f32.mrb[0].mxu0
    %871 = vmatprep.mubr.f32.mxu0 0.0
    %872 = vmatmul.mubr.f32.gmra.mrb[0].mxu0 %v734
    %v873 = vpop.f32.mrb[0].mxu0
    %v874 = vadd.f32 0.0, %v873
    %v875 = vpop.f32.mrb[0].mxu0
    %876 = vmatprep.mubr.f32.mxu0 0.0
    %877 = vmatmul.mubr.f32.gmra.mrb[0].mxu0 %v737
    %v878 = vpop.f32.mrb[0].mxu0
    %v879 = vadd.f32 0.0, %v878
    %v880 = vpop.f32.mrb[0].mxu0
    %881 = vmatprep.mubr.f32.mxu0 0.0
    %882 = vmatmul.mubr.f32.gmra.mrb[0].mxu0 %v740
    %v883 = vpop.f32.mrb[0].mxu0
    %v884 = vadd.f32 0.0, %v883
    %v885 = vpop.f32.mrb[0].mxu0
    %886 = vdwg.mxu0
    %vm887 = vcmask 31744
    %v888 = vsel %vm887, %v809, -inf
    %v889 = vsel %vm887, %v814, -inf
    %v890 = vsel %vm887, %v819, -inf
    %v891 = vmax.f32 %v888, %v890
    %v892 = vsel %vm887, %v824, -inf
    %v893 = vmax.f32 %v889, %v892
    %v894 = vsel %vm887, %v829, -inf
    %v895 = vmax.f32 %v891, %v894
    %v896 = vsel %vm887, %v834, -inf
    %v897 = vmax.f32 %v893, %v896
    %v898 = vsel %vm887, %v839, -inf
    %v899 = vmax.f32 %v895, %v898
    %v900 = vsel %vm887, %v844, -inf
    %v901 = vmax.f32 %v897, %v900
    %v902 = vmax.f32 %v899, %v901
    %v903 = vrot.slane %v902, 4
    %v904 = vmax.f32 %v902, %v903
    %v905 = vrot.slane %v904, 2
    %v906 = vmax.f32 %v904, %v905
    %v907 = vrot.slane %v906, 1
    %v908 = vmax.f32 %v906, %v907
    %v909 = vsel %vm887, %v849, -inf
    %v910 = vsel %vm887, %v854, -inf
    %v911 = vsel %vm887, %v859, -inf
    %v912 = vmax.f32 %v909, %v911
    %v913 = vsel %vm887, %v864, -inf
    %v914 = vmax.f32 %v910, %v913
    %v915 = vsel %vm887, %v869, -inf
    %v916 = vmax.f32 %v912, %v915
    %v917 = vsel %vm887, %v874, -inf
    %v918 = vmax.f32 %v914, %v917
    %v919 = vsel %vm887, %v879, -inf
    %v920 = vmax.f32 %v916, %v919
    %v921 = vsel %vm887, %v884, -inf
    %v922 = vmax.f32 %v918, %v921
    %v923 = vmax.f32 %v920, %v922
    %v924 = vrot.slane %v923, 4
    %v925 = vmax.f32 %v923, %v924
    %v926 = vrot.slane %v925, 2
    %v927 = vmax.f32 %v925, %v926
    %v928 = vrot.slane %v927, 1
    %v929 = vmax.f32 %v927, %v928
    %v932 = vsel %vm227, %v929, %v908
    %v934 = vmax.f32 %v626, %v932
    %v935 = vsub.f32 %v626, %v934
    %v936 = vmul.f32 %v935, 1.442695
    %v937 = vpow.pop %v936
    %v940 = vunpack.c.l.s4 1966171168
    %v941 = vunpack.c.0.s8 %v940
    %v942 = vlaneseq
    %v943 = vshrl.u32 %v942, 7
    %v944 = vsub.s32 %v941, %v943
    %v945 = vrot.slane %v934, %v944
    %v946 = vcombine.high %v945, %v945
    %v948 = vunpack.c.l.s4 1966171168
    %v949 = vunpack.c.0.s8 %v948
    %v950 = vlaneseq
    %v951 = vshrl.u32 %v950, 7
    %v952 = vsub.s32 %v949, %v951
    %v953 = vrot.slane %v945, %v952
    %v955 = vunpack.c.l.s4 1966171168
    %v956 = vunpack.c.0.s8 %v955
    %v957 = vlaneseq
    %v958 = vshrl.u32 %v957, 7
    %v959 = vsub.s32 %v956, %v958
    %v960 = vrot.slane %v946, %v959
    %v961 = vlaneseq
    %v962 = vshrl.u32 %v961, 7
    %v963 = vsub.s32 0, %v962
    %v964 = vrot.slane %v953, %v963
    %v965 = vlaneseq
    %v966 = vshrl.u32 %v965, 7
    %v967 = vsub.s32 0, %v966
    %v968 = vrot.slane %v960, %v967
    %v971 = vsub.f32 %v809, %v964
    %v972 = vsub.f32 %v814, %v964
    %v973 = vsub.f32 %v819, %v964
    %v974 = vsub.f32 %v824, %v964
    %v975 = vsub.f32 %v829, %v964
    %v976 = vsub.f32 %v834, %v964
    %v977 = vsub.f32 %v839, %v964
    %v978 = vsub.f32 %v844, %v964
    %v979 = vsub.f32 %v849, %v968
    %v980 = vsub.f32 %v854, %v968
    %v981 = vsub.f32 %v859, %v968
    %v982 = vsub.f32 %v864, %v968
    %v983 = vsub.f32 %v869, %v968
    %v984 = vsub.f32 %v874, %v968
    %v985 = vsub.f32 %v879, %v968
    %v986 = vsub.f32 %v884, %v968
    %v987 = vmul.f32 %v971, 1.442695
    %v988 = vpow.pop %v987
    %v989 = vmul.f32 %v972, 1.442695
    %v990 = vpow.pop %v989
    %v991 = vmul.f32 %v973, 1.442695
    %v992 = vpow.pop %v991
    %v993 = vmul.f32 %v974, 1.442695
    %v994 = vpow.pop %v993
    %v995 = vmul.f32 %v975, 1.442695
    %v996 = vpow.pop %v995
    %v997 = vmul.f32 %v976, 1.442695
    %v998 = vpow.pop %v997
    %v999 = vmul.f32 %v977, 1.442695
    %v1000 = vpow.pop %v999
    %v1001 = vmul.f32 %v978, 1.442695
    %v1002 = vpow.pop %v1001
    %v1003 = vmul.f32 %v979, 1.442695
    %v1004 = vpow.pop %v1003
    %v1005 = vmul.f32 %v980, 1.442695
    %v1006 = vpow.pop %v1005
    %v1007 = vmul.f32 %v981, 1.442695
    %v1008 = vpow.pop %v1007
    %v1009 = vmul.f32 %v982, 1.442695
    %v1010 = vpow.pop %v1009
    %v1011 = vmul.f32 %v983, 1.442695
    %v1012 = vpow.pop %v1011
    %v1013 = vmul.f32 %v984, 1.442695
    %v1014 = vpow.pop %v1013
    %v1015 = vmul.f32 %v985, 1.442695
    %v1016 = vpow.pop %v1015
    %v1017 = vmul.f32 %v986, 1.442695
    %v1018 = vpow.pop %v1017
    %v1019 = vsel %vm887, %v988, 0.0
    %v1020 = vsel %vm887, %v990, 0.0
    %v1021 = vadd.f32 %v1019, %v1020
    %v1022 = vsel %vm887, %v992, 0.0
    %v1023 = vadd.f32 %v1021, %v1022
    %v1024 = vsel %vm887, %v994, 0.0
    %v1025 = vadd.f32 %v1023, %v1024
    %v1026 = vsel %vm887, %v996, 0.0
    %v1027 = vadd.f32 %v1025, %v1026
    %v1028 = vsel %vm887, %v998, 0.0
    %v1029 = vadd.f32 %v1027, %v1028
    %v1030 = vsel %vm887, %v1000, 0.0
    %v1031 = vadd.f32 %v1029, %v1030
    %v1032 = vsel %vm887, %v1002, 0.0
    %v1033 = vadd.f32 %v1031, %v1032
    %v1034 = vrot.slane %v1033, 4
    %v1035 = vadd.f32 %v1033, %v1034
    %v1036 = vrot.slane %v1035, 2
    %v1037 = vadd.f32 %v1035, %v1036
    %v1038 = vrot.slane %v1037, 1
    %v1039 = vadd.f32 %v1037, %v1038
    %v1040 = vsel %vm887, %v1004, 0.0
    %v1041 = vsel %vm887, %v1006, 0.0
    %v1042 = vadd.f32 %v1040, %v1041
    %v1043 = vsel %vm887, %v1008, 0.0
    %v1044 = vadd.f32 %v1042, %v1043
    %v1045 = vsel %vm887, %v1010, 0.0
    %v1046 = vadd.f32 %v1044, %v1045
    %v1047 = vsel %vm887, %v1012, 0.0
    %v1048 = vadd.f32 %v1046, %v1047
    %v1049 = vsel %vm887, %v1014, 0.0
    %v1050 = vadd.f32 %v1048, %v1049
    %v1051 = vsel %vm887, %v1016, 0.0
    %v1052 = vadd.f32 %v1050, %v1051
    %v1053 = vsel %vm887, %v1018, 0.0
    %v1054 = vadd.f32 %v1052, %v1053
    %v1055 = vrot.slane %v1054, 4
    %v1056 = vadd.f32 %v1054, %v1055
    %v1057 = vrot.slane %v1056, 2
    %v1058 = vadd.f32 %v1056, %v1057
    %v1059 = vrot.slane %v1058, 1
    %v1060 = vadd.f32 %v1058, %v1059
    %v1063 = vsel %vm227, %v1060, %v1039
    %v1065 = vadd.f32 %v937, %v1063
    %v1066 = vrcp.pop %v1065
    %v1067 = vmul.f32 %v937, %v1066
    %v1070 = vunpack.c.l.s4 1966171168
    %v1071 = vunpack.c.0.s8 %v1070
    %v1072 = vlaneseq
    %v1073 = vshrl.u32 %v1072, 7
    %v1074 = vsub.s32 %v1071, %v1073
    %v1075 = vrot.slane %v1066, %v1074
    %v1076 = vcombine.high %v1075, %v1075
    %v1078 = vunpack.c.l.s4 1966171168
    %v1079 = vunpack.c.0.s8 %v1078
    %v1080 = vlaneseq
    %v1081 = vshrl.u32 %v1080, 7
    %v1082 = vsub.s32 %v1079, %v1081
    %v1083 = vrot.slane %v1075, %v1082
    %v1085 = vunpack.c.l.s4 1966171168
    %v1086 = vunpack.c.0.s8 %v1085
    %v1087 = vlaneseq
    %v1088 = vshrl.u32 %v1087, 7
    %v1089 = vsub.s32 %v1086, %v1088
    %v1090 = vrot.slane %v1076, %v1089
    %v1091 = vlaneseq
    %v1092 = vshrl.u32 %v1091, 7
    %v1093 = vsub.s32 0, %v1092
    %v1094 = vrot.slane %v1083, %v1093
    %v1095 = vlaneseq
    %v1096 = vshrl.u32 %v1095, 7
    %v1097 = vsub.s32 0, %v1096
    %v1098 = vrot.slane %v1090, %v1097
    %v1101 = vmul.f32 %v988, %v1094
    %v1102 = vmul.f32 %v990, %v1094
    %v1103 = vmul.f32 %v992, %v1094
    %v1104 = vmul.f32 %v994, %v1094
    %v1105 = vmul.f32 %v996, %v1094
    %v1106 = vmul.f32 %v998, %v1094
    %v1107 = vmul.f32 %v1000, %v1094
    %v1108 = vmul.f32 %v1002, %v1094
    %v1109 = vmul.f32 %v1004, %v1098
    %v1110 = vmul.f32 %v1006, %v1098
    %v1111 = vmul.f32 %v1008, %v1098
    %v1112 = vmul.f32 %v1010, %v1098
    %v1113 = vmul.f32 %v1012, %v1098
    %v1114 = vmul.f32 %v1014, %v1098
    %v1115 = vmul.f32 %v1016, %v1098
    %v1116 = vmul.f32 %v1018, %v1098
    %v1117 = vpack.c.bf16 %v1102, %v1101
    %v1118 = vpack.c.bf16 %v1104, %v1103
    %v1119 = vpack.c.bf16 %v1106, %v1105
    %v1120 = vpack.c.bf16 %v1108, %v1107
    %v1121 = vpack.c.bf16 %v1110, %v1109
    %v1122 = vpack.c.bf16 %v1112, %v1111
    %v1123 = vpack.c.bf16 %v1114, %v1113
    %v1124 = vpack.c.bf16 %v1116, %v1115
    %v1125 = vpack.c.bf16 %v1067, %v1067
    %v1127 = vsel %vm887, %v1125, 0
    %vm1129 = vcmask 1041408
    %v1131 = vsel %vm1129, %v554, 0
    %1133 = vmatprep.subr.bf16.mxu0 0
    %1134 = vmatpush1.bf16.msra.mxu0 %v1131
    %1135 = vmatprep.subr.bf16.mxu0 0
    %1136 = vmatpush1.bf16.msra.mxu0 0
    %1137 = vmatprep.subr.bf16.mxu0 0
    %1138 = vmatpush1.bf16.msra.mxu0 0
    %1139 = vmatprep.subr.bf16.mxu0 0
    %1140 = vmatpush1.bf16.msra.mxu0 0
    %1141 = vmatprep.subr.bf16.mxu0 0
    %1142 = vmatpush1.bf16.msra.mxu0 0
    %1143 = vmatprep.subr.bf16.mxu0 0
    %1144 = vmatpush1.bf16.msra.mxu0 0
    %1145 = vmatprep.subr.bf16.mxu0 0
    %1146 = vmatpush1.bf16.msra.mxu0 0
    %1147 = vmatprep.subr.bf16.mxu0 0
    %1148 = vmatpush1.bf16.msra.mxu0 0
    %1149 = vmatprep.subr.bf16.mxu0 0
    %1150 = vmatpush1.bf16.msra.mxu0 0
    %1151 = vmatprep.subr.bf16.mxu0 0
    %1152 = vmatpush1.bf16.msra.mxu0 0
    %1153 = vmatprep.subr.bf16.mxu0 0
    %1154 = vmatpush1.bf16.msra.mxu0 0
    %1155 = vmatprep.subr.bf16.mxu0 0
    %1156 = vmatpush1.bf16.msra.mxu0 0
    %1157 = vmatprep.subr.bf16.mxu0 0
    %1158 = vmatpush1.bf16.msra.mxu0 0
    %1159 = vmatprep.subr.bf16.mxu0 0
    %1160 = vmatpush1.bf16.msra.mxu0 0
    %1161 = vmatprep.subr.bf16.mxu0 0
    %1162 = vmatpush1.bf16.msra.mxu0 0
    %1163 = vmatprep.subr.bf16.mxu0 0
    %1164 = vmatpush1.bf16.msra.mxu0 0
    %1165 = vmatprep.mubr.bf16.mxu0 0
    %1166 = vmatmul.mubr.bf16.gmra.mrb[0].mxu0 %v1127
    %v1167 = vpop.f32.mrb[0].mxu0
    %v1168 = vadd.f32 0.0, %v1167
    %v1169 = vpop.f32.mrb[0].mxu0
    %v1170 = vpop.f32.mrb[0].mxu0
    %v1171 = vpop.f32.mrb[0].mxu0
    %1172 = vdwg.mxu0
    %v1174 = vsel %vm887, %v1117, 0
    %v1177 = vsel %vm887, %v1118, 0
    %v1180 = vsel %vm887, %v1119, 0
    %v1183 = vsel %vm887, %v1120, 0
    %v1186 = vsel %vm887, %v1121, 0
    %v1189 = vsel %vm887, %v1122, 0
    %v1192 = vsel %vm887, %v1123, 0
    %v1195 = vsel %vm887, %v1124, 0
    %1197 = vmatprep.subr.bf16.mxu0 0
    %1198 = vmatpush1.bf16.msra.mxu0 %v1131
    %1199 = vmatprep.subr.bf16.mxu0 0
    %1200 = vmatpush1.bf16.msra.mxu0 0
    %1201 = vmatprep.subr.bf16.mxu0 0
    %1202 = vmatpush1.bf16.msra.mxu0 0
    %1203 = vmatprep.subr.bf16.mxu0 0
    %1204 = vmatpush1.bf16.msra.mxu0 0
    %1205 = vmatprep.subr.bf16.mxu0 0
    %1206 = vmatpush1.bf16.msra.mxu0 0
    %1207 = vmatprep.subr.bf16.mxu0 0
    %1208 = vmatpush1.bf16.msra.mxu0 0
    %1209 = vmatprep.subr.bf16.mxu0 0
    %1210 = vmatpush1.bf16.msra.mxu0 0
    %1211 = vmatprep.subr.bf16.mxu0 0
    %1212 = vmatpush1.bf16.msra.mxu0 0
    %1213 = vmatprep.subr.bf16.mxu0 0
    %1214 = vmatpush1.bf16.msra.mxu0 0
    %1215 = vmatprep.subr.bf16.mxu0 0
    %1216 = vmatpush1.bf16.msra.mxu0 0
    %1217 = vmatprep.subr.bf16.mxu0 0
    %1218 = vmatpush1.bf16.msra.mxu0 0
    %1219 = vmatprep.subr.bf16.mxu0 0
    %1220 = vmatpush1.bf16.msra.mxu0 0
    %1221 = vmatprep.subr.bf16.mxu0 0
    %1222 = vmatpush1.bf16.msra.mxu0 0
    %1223 = vmatprep.subr.bf16.mxu0 0
    %1224 = vmatpush1.bf16.msra.mxu0 0
    %1225 = vmatprep.subr.bf16.mxu0 0
    %1226 = vmatpush1.bf16.msra.mxu0 0
    %1227 = vmatprep.subr.bf16.mxu0 0
    %1228 = vmatpush1.bf16.msra.mxu0 0
    %1229 = vmatprep.mubr.bf16.mxu0 0
    %1230 = vmatmul.mubr.bf16.gmra.mrb[0].mxu0 %v1174
    %v1231 = vpop.f32.mrb[0].mxu0
    %v1232 = vadd.f32 0.0, %v1231
    %v1233 = vpop.f32.mrb[0].mxu0
    %v1234 = vpop.f32.mrb[0].mxu0
    %v1235 = vadd.f32 0.0, %v1234
    %v1236 = vpop.f32.mrb[0].mxu0
    %1237 = vmatprep.mubr.bf16.mxu0 0
    %1238 = vmatmul.mubr.bf16.gmra.mrb[0].mxu0 %v1177
    %v1239 = vpop.f32.mrb[0].mxu0
    %v1240 = vadd.f32 0.0, %v1239
    %v1241 = vpop.f32.mrb[0].mxu0
    %v1242 = vpop.f32.mrb[0].mxu0
    %v1243 = vadd.f32 0.0, %v1242
    %v1244 = vpop.f32.mrb[0].mxu0
    %1245 = vmatprep.mubr.bf16.mxu0 0
    %1246 = vmatmul.mubr.bf16.gmra.mrb[0].mxu0 %v1180
    %v1247 = vpop.f32.mrb[0].mxu0
    %v1248 = vadd.f32 0.0, %v1247
    %v1249 = vpop.f32.mrb[0].mxu0
    %v1250 = vpop.f32.mrb[0].mxu0
    %v1251 = vadd.f32 0.0, %v1250
    %v1252 = vpop.f32.mrb[0].mxu0
    %1253 = vmatprep.mubr.bf16.mxu0 0
    %1254 = vmatmul.mubr.bf16.gmra.mrb[0].mxu0 %v1183
    %v1255 = vpop.f32.mrb[0].mxu0
    %v1256 = vadd.f32 0.0, %v1255
    %v1257 = vpop.f32.mrb[0].mxu0
    %v1258 = vpop.f32.mrb[0].mxu0
    %v1259 = vadd.f32 0.0, %v1258
    %v1260 = vpop.f32.mrb[0].mxu0
    %1261 = vmatprep.mubr.bf16.mxu0 0
    %1262 = vmatmul.mubr.bf16.gmra.mrb[0].mxu0 %v1186
    %v1263 = vpop.f32.mrb[0].mxu0
    %v1264 = vadd.f32 0.0, %v1263
    %v1265 = vpop.f32.mrb[0].mxu0
    %v1266 = vpop.f32.mrb[0].mxu0
    %v1267 = vadd.f32 0.0, %v1266
    %v1268 = vpop.f32.mrb[0].mxu0
    %1269 = vmatprep.mubr.bf16.mxu0 0
    %1270 = vmatmul.mubr.bf16.gmra.mrb[0].mxu0 %v1189
    %v1271 = vpop.f32.mrb[0].mxu0
    %v1272 = vadd.f32 0.0, %v1271
    %v1273 = vpop.f32.mrb[0].mxu0
    %v1274 = vpop.f32.mrb[0].mxu0
    %v1275 = vadd.f32 0.0, %v1274
    %v1276 = vpop.f32.mrb[0].mxu0
    %1277 = vmatprep.mubr.bf16.mxu0 0
    %1278 = vmatmul.mubr.bf16.gmra.mrb[0].mxu0 %v1192
    %v1279 = vpop.f32.mrb[0].mxu0
    %v1280 = vadd.f32 0.0, %v1279
    %v1281 = vpop.f32.mrb[0].mxu0
    %v1282 = vpop.f32.mrb[0].mxu0
    %v1283 = vadd.f32 0.0, %v1282
    %v1284 = vpop.f32.mrb[0].mxu0
    %1285 = vmatprep.mubr.bf16.mxu0 0
    %1286 = vmatmul.mubr.bf16.gmra.mrb[0].mxu0 %v1195
    %v1287 = vpop.f32.mrb[0].mxu0
    %v1288 = vadd.f32 0.0, %v1287
    %v1289 = vpop.f32.mrb[0].mxu0
    %v1290 = vpop.f32.mrb[0].mxu0
    %v1291 = vadd.f32 0.0, %v1290
    %v1292 = vpop.f32.mrb[0].mxu0
    %1293 = vdwg.mxu0
    %1295 = vrot.lane.b32.xlu0 %v372, 64
    %v1296 = vpop.permute.xlu0 %1295
    %v1298 = vmul.f32 %v1168, %v1296
    %1315 = vrot.lane.b32.xlu0 %v652, 64
    %v1316 = vpop.permute.xlu0 %1315
    %1317 = vrot.lane.b32.xlu0 %v653, 64
    %v1318 = vpop.permute.xlu0 %1317
    %1319 = vrot.lane.b32.xlu0 %v654, 64
    %v1320 = vpop.permute.xlu0 %1319
    %1321 = vrot.lane.b32.xlu0 %v655, 64
    %v1322 = vpop.permute.xlu0 %1321
    %1323 = vrot.lane.b32.xlu0 %v656, 64
    %v1324 = vpop.permute.xlu0 %1323
    %1325 = vrot.lane.b32.xlu0 %v657, 64
    %v1326 = vpop.permute.xlu0 %1325
    %1327 = vrot.lane.b32.xlu0 %v658, 64
    %v1328 = vpop.permute.xlu0 %1327
    %1329 = vrot.lane.b32.xlu0 %v659, 64
    %v1330 = vpop.permute.xlu0 %1329
    %1331 = vrot.lane.b32.xlu0 %v660, 64
    %v1332 = vpop.permute.xlu0 %1331
    %1333 = vrot.lane.b32.xlu0 %v661, 64
    %v1334 = vpop.permute.xlu0 %1333
    %1335 = vrot.lane.b32.xlu0 %v662, 64
    %v1336 = vpop.permute.xlu0 %1335
    %1337 = vrot.lane.b32.xlu0 %v663, 64
    %v1338 = vpop.permute.xlu0 %1337
    %1339 = vrot.lane.b32.xlu0 %v664, 64
    %v1340 = vpop.permute.xlu0 %1339
    %1341 = vrot.lane.b32.xlu0 %v665, 64
    %v1342 = vpop.permute.xlu0 %1341
    %1343 = vrot.lane.b32.xlu0 %v666, 64
    %v1344 = vpop.permute.xlu0 %1343
    %1345 = vrot.lane.b32.xlu0 %v667, 64
    %v1346 = vpop.permute.xlu0 %1345
    %v1363 = vmul.f32 %v1232, %v1316
    %v1364 = vmul.f32 %v1235, %v1318
    %v1365 = vmul.f32 %v1240, %v1320
    %v1366 = vmul.f32 %v1243, %v1322
    %v1367 = vmul.f32 %v1248, %v1324
    %v1368 = vmul.f32 %v1251, %v1326
    %v1369 = vmul.f32 %v1256, %v1328
    %v1370 = vmul.f32 %v1259, %v1330
    %v1371 = vmul.f32 %v1264, %v1332
    %v1372 = vmul.f32 %v1267, %v1334
    %v1373 = vmul.f32 %v1272, %v1336
    %v1374 = vmul.f32 %v1275, %v1338
    %v1375 = vmul.f32 %v1280, %v1340
    %v1376 = vmul.f32 %v1283, %v1342
    %v1377 = vmul.f32 %v1288, %v1344
    %v1378 = vmul.f32 %v1291, %v1346
    %v1379 = vsel %vm127, %v1363, 0.0
    %v1380 = vsel %vm127, %v1364, 0.0
    %v1381 = vadd.f32 %v1379, %v1380
    %v1382 = vsel %vm127, %v1365, 0.0
    %v1383 = vadd.f32 %v1381, %v1382
    %v1384 = vsel %vm127, %v1366, 0.0
    %v1385 = vadd.f32 %v1383, %v1384
    %v1386 = vsel %vm127, %v1367, 0.0
    %v1387 = vadd.f32 %v1385, %v1386
    %v1388 = vsel %vm127, %v1368, 0.0
    %v1389 = vadd.f32 %v1387, %v1388
    %v1390 = vsel %vm127, %v1369, 0.0
    %v1391 = vadd.f32 %v1389, %v1390
    %v1392 = vsel %vm127, %v1370, 0.0
    %v1393 = vadd.f32 %v1391, %v1392
    %v1394 = vrot.slane %v1393, 4
    %v1395 = vadd.f32 %v1393, %v1394
    %v1396 = vrot.slane %v1395, 2
    %v1397 = vadd.f32 %v1395, %v1396
    %v1398 = vrot.slane %v1397, 1
    %v1399 = vadd.f32 %v1397, %v1398
    %v1400 = vsel %vm127, %v1371, 0.0
    %v1401 = vsel %vm127, %v1372, 0.0
    %v1402 = vadd.f32 %v1400, %v1401
    %v1403 = vsel %vm127, %v1373, 0.0
    %v1404 = vadd.f32 %v1402, %v1403
    %v1405 = vsel %vm127, %v1374, 0.0
    %v1406 = vadd.f32 %v1404, %v1405
    %v1407 = vsel %vm127, %v1375, 0.0
    %v1408 = vadd.f32 %v1406, %v1407
    %v1409 = vsel %vm127, %v1376, 0.0
    %v1410 = vadd.f32 %v1408, %v1409
    %v1411 = vsel %vm127, %v1377, 0.0
    %v1412 = vadd.f32 %v1410, %v1411
    %v1413 = vsel %vm127, %v1378, 0.0
    %v1414 = vadd.f32 %v1412, %v1413
    %v1415 = vrot.slane %v1414, 4
    %v1416 = vadd.f32 %v1414, %v1415
    %v1417 = vrot.slane %v1416, 2
    %v1418 = vadd.f32 %v1416, %v1417
    %v1419 = vrot.slane %v1418, 1
    %v1420 = vadd.f32 %v1418, %v1419
    %v1423 = vsel %vm227, %v1420, %v1399
    %v1425 = vadd.f32 %v1298, %v1423
    %v1426 = vpack.c.bf16 %v1425, %v1425
    %v1427 = vld [vmem:[#allocation8] sm:$0xf]
    %v1428 = vld [vmem:[#allocation8 + $0x4] sm:$0xf]
    %v1429 = vld [vmem:[#allocation8 + $0x8] sm:$0xf]
    %v1430 = vld [vmem:[#allocation8 + $0xc] sm:$0xf]
    %v1431 = vld [vmem:[#allocation8 + $0x10] sm:$0xf]
    %v1432 = vld [vmem:[#allocation8 + $0x14] sm:$0xf]
    %v1433 = vld [vmem:[#allocation8 + $0x18] sm:$0xf]
    %v1434 = vld [vmem:[#allocation8 + $0x1c] sm:$0xf]
    %v1435 = vld [vmem:[%s8] sm:$0x1]
    %v1437 = vlaneseq
    %v1438 = vshrl.u32 %v1437, 7
    %v1439 = vsub.s32 0, %v1438
    %v1440 = vrot.slane %v1435, %v1439
    %v1450 = vunpack.c.l.b16 %v1427
    %v1451 = vunpack.c.l.b16 %v1428
    %v1452 = vunpack.c.l.b16 %v1429
    %v1453 = vunpack.c.l.b16 %v1430
    %v1454 = vunpack.c.l.b16 %v1431
    %v1455 = vunpack.c.l.b16 %v1432
    %v1456 = vunpack.c.l.b16 %v1433
    %v1457 = vunpack.c.l.b16 %v1434
    %v1458 = vpack.c.b16 %v1451, %v1450
    %v1459 = vpack.c.b16 %v1453, %v1452
    %v1460 = vpack.c.b16 %v1455, %v1454
    %v1461 = vpack.c.b16 %v1457, %v1456
    %v1467 = vsel %vm127, %v1426, 0
    %1469 = vmatprep.subr.bf16.mxu0 0
    %1470 = vmatpush1.bf16.msra.mxu0 %v1458
    %1471 = vmatprep.subr.bf16.mxu0 0
    %1472 = vmatpush1.bf16.msra.mxu0 %v1459
    %1473 = vmatprep.subr.bf16.mxu0 0
    %1474 = vmatpush1.bf16.msra.mxu0 %v1460
    %1475 = vmatprep.subr.bf16.mxu0 0
    %1476 = vmatpush1.bf16.msra.mxu0 %v1461
    %1477 = vmatprep.subr.bf16.mxu0 0
    %1478 = vmatpush1.bf16.msra.mxu0 0
    %1479 = vmatprep.subr.bf16.mxu0 0
    %1480 = vmatpush1.bf16.msra.mxu0 0
    %1481 = vmatprep.subr.bf16.mxu0 0
    %1482 = vmatpush1.bf16.msra.mxu0 0
    %1483 = vmatprep.subr.bf16.mxu0 0
    %1484 = vmatpush1.bf16.msra.mxu0 0
    %1485 = vmatprep.subr.bf16.mxu0 0
    %1486 = vmatpush1.bf16.msra.mxu0 0
    %1487 = vmatprep.subr.bf16.mxu0 0
    %1488 = vmatpush1.bf16.msra.mxu0 0
    %1489 = vmatprep.subr.bf16.mxu0 0
    %1490 = vmatpush1.bf16.msra.mxu0 0
    %1491 = vmatprep.subr.bf16.mxu0 0
    %1492 = vmatpush1.bf16.msra.mxu0 0
    %1493 = vmatprep.subr.bf16.mxu0 0
    %1494 = vmatpush1.bf16.msra.mxu0 0
    %1495 = vmatprep.subr.bf16.mxu0 0
    %1496 = vmatpush1.bf16.msra.mxu0 0
    %1497 = vmatprep.subr.bf16.mxu0 0
    %1498 = vmatpush1.bf16.msra.mxu0 0
    %1499 = vmatprep.subr.bf16.mxu0 0
    %1500 = vmatpush1.bf16.msra.mxu0 0
    %1501 = vmatprep.mubr.bf16.mxu0 0
    %1502 = vmatmul.mubr.bf16.gmra.mrb[0].mxu0 %v1467
    %v1503 = vpop.f32.mrb[0].mxu0
    %v1504 = vadd.f32 %v1440, %v1503
    %v1505 = vpop.f32.mrb[0].mxu0
    %v1506 = vpop.f32.mrb[0].mxu0
    %v1507 = vpop.f32.mrb[0].mxu0
    %1508 = vdwg.mxu0
    %1509 = vst [vmem:[#allocation10] sm:$0x3] %v1504
    // Predicated region
    $region62: #{tpu_custom_call.1} parent=1 // pred_check
      _
    $region63: #{tpu_custom_call.1} parent=1 // pred_check_branch
      %1511 = sbr.rel (0) target = $region65
    $region64: #{tpu_custom_call.1} parent=1 // pred_region
      %s1513 = ssub.s32 32, 32
      %1514 = vsyncadd [#allocation4], %s1513
      %s1516 = sshll.u32 [#allocation10], 4
      %s1517 = int_to_ptr.vmem [resolvable:$true] %s1516
      %1519 = dma.vmem_to_hbm [thread:$0]  %s1517, 32, %s11, [#allocation4]
    $region65: #{tpu_custom_call.1} parent=1 // pred_fallthru
      _
    // Predicated region
    $region66: #{tpu_custom_call.1} parent=1 // pred_check
      _
    $region67: #{tpu_custom_call.1} parent=1 // pred_check_branch
      %1521 = sbr.rel (0) target = $region69
    $region68: #{tpu_custom_call.1} parent=1 // pred_region
      %1522 = dma.done [#allocation4], 32
    $region69: #{tpu_custom_call.1} parent=1 // pred_fallthru
      _
    %1523 = vsyncpa [#allocation3], 1
    %1524 = vsyncpa [#allocation6], 1
    %1525 = vsyncpa [#allocation9], 1
    %1526 = vsyncpa [#allocation4], 1

</llo_original>
